<compile_context>
chip_gen: v6e
topology: v6e:2x2x1
jax: 0.10.0
libtpu: 0.0.40
codegen_flags: <defaults>
</compile_context>

<pallas_src>
import jax
import jax.numpy as jnp
from jax.experimental import pallas as pl
from jax.experimental.pallas import tpu as pltpu


def _round_up(x, m):
    return (x + m - 1) // m * m


def _pick_row_tile(H, W, target_elems=2048):
    """Largest row tile tm dividing H with tm % 8 == 0 and tm*W a multiple of
    128 (lane/sublane friendly output blocks), capped at ~target_elems rows of
    the flattened (M, F) output.  Falls back to tm = H (one tile per image)."""
    best, found = H, False
    for tm in range(1, H + 1):
        if H % tm == 0 and tm % 8 == 0 and (tm * W) % 128 == 0 and tm * W <= target_elems:
            best, found = tm, True
    return best if found else H


# ----------------------------------------------------------------------------
# Kernel 1: fused im2col 3x3 conv + bias + ReLU (backbone hot path, bf16 MXU)
#   input : padded image (N, H+2, W+2, Cin) bf16 (whole image resident per n)
#   output: NHWC rows (N*H*W, F) f32  and  NCHW rows (N, F, H*W) f32
# ----------------------------------------------------------------------------
def conv3x3_relu_pallas(img_nhwc, w_flat, b):
    """img_nhwc: (N,H,W,Cin) f32; w_flat: (9*Cin, F) f32 in (kh,kw,cin) order;
    b: (1, F) f32.  Returns (feats_flat (N*H*W, F), feats_nchw (N, F, H*W))."""
    N, H, W, Cin = img_nhwc.shape
    F = w_flat.shape[1]
    tm = _pick_row_tile(H, W)
    n_t = H // tm
    assert (tm * W) % 8 == 0 or (N == 1 and n_t == 1), "row tile must keep blocks 8-aligned"

    # Zero-pad spatially (cheap: only +2 rows/cols of a Cin=3 image) and cast
    # to bf16.  The 9x im2col expansion happens *inside* the kernel in VMEM.
    xpad = jnp.pad(img_nhwc, ((0, 0), (1, 1), (1, 1), (0, 0))).astype(jnp.bfloat16)
    w_bf = w_flat.astype(jnp.bfloat16)

    def kernel(xp_ref, w_ref, b_ref, out_flat_ref, out_nchw_ref):
        # xp_ref: (1, H+2, W+2, Cin) -- full padded image of batch n, resident
        # in VMEM across the row-tile axis t (index_map ignores t).
        t = pl.program_id(1)
        row0 = pl.multiple_of(t * tm, tm)
        slab = xp_ref[0, pl.ds(row0, tm + 2), :, :]           # (tm+2, W+2, Cin)
        # Fused im2col: 9 shifted windows, concatenated along channels in the
        # same (kh, kw, cin) order as the rows of w_ref.
        pieces = [slab[kh:kh + tm, kw:kw + W, :]
                  for kh in range(3) for kw in range(3)]       # each (tm, W, Cin)
        patches = jnp.concatenate(pieces, axis=-1)             # (tm, W, 9*Cin)
        patches = patches.reshape(tm * W, 9 * Cin)
        acc = jnp.dot(patches, w_ref[...], preferred_element_type=jnp.float32)
        acc = jnp.maximum(acc + b_ref[...], 0.0)               # bias + ReLU
        out_flat_ref[...] = acc                                 # NHWC rows
        out_nchw_ref[...] = acc.T.reshape(1, F, tm * W)         # NCHW rows

    out_flat, out_nchw = pl.pallas_call(
        kernel,
        out_shape=(jax.ShapeDtypeStruct((N * H * W, F), jnp.float32),
                   jax.ShapeDtypeStruct((N, F, H * W), jnp.float32)),
        grid_spec=pltpu.PrefetchScalarGridSpec(
            num_scalar_prefetch=0,
            grid=(N, n_t),
            in_specs=[
                pl.BlockSpec((1, H + 2, W + 2, Cin), lambda n, t: (n, 0, 0, 0)),
                pl.BlockSpec((9 * Cin, F), lambda n, t: (0, 0)),   # resident
                pl.BlockSpec((1, F), lambda n, t: (0, 0)),         # resident
            ],
            out_specs=(
                pl.BlockSpec((tm * W, F), lambda n, t: (n * n_t + t, 0)),
                pl.BlockSpec((1, F, tm * W), lambda n, t: (n, 0, t)),
            ),
        ),
        compiler_params=pltpu.CompilerParams(
            dimension_semantics=("parallel", "parallel"),  # megacore split on v7x
            vmem_limit_bytes=32 * 1024 * 1024),
    )(xpad, w_bf, b)
    return out_flat, out_nchw


# ----------------------------------------------------------------------------
# Kernel 2: point gather (row DMAs from HBM, indices scalar-prefetched to SMEM)
#           + fused dual linear heads (one lane-padded (F, 128) bf16 matmul)
# ----------------------------------------------------------------------------
def _gather_heads_kernel(idx_ref, feats_hbm, w_ref, b_ref,
                         feats_out_ref, logits_ref, gbuf, sems):
    tp = feats_out_ref.shape[0]
    base = pl.program_id(0) * tp
    # Read all SMEM indices and issue all row DMAs before any wait.
    for r in range(tp):
        pltpu.make_async_copy(feats_hbm.at[idx_ref[base + r]],
                              gbuf.at[r], sems.at[r]).start()
    for r in range(tp):
        pltpu.make_async_copy(feats_hbm.at[0], gbuf.at[r], sems.at[r]).wait()
    g = gbuf[...]
    feats_out_ref[...] = g                                   # exact f32 gather
    logits_ref[...] = (
        jnp.dot(g.astype(jnp.bfloat16), w_ref[...],
                preferred_element_type=jnp.float32) + b_ref[...])


def gather_and_heads_pallas(flat_idx, feats_flat, w_heads_bf16, b_heads):
    P = int(flat_idx.shape[0])
    NHW, F = feats_flat.shape
    CW = w_heads_bf16.shape[1]
    tp = 128 if P >= 128 else _round_up(P, 8)
    P_pad = _round_up(P, tp)
    idx_pad = jnp.zeros((P_pad,), jnp.int32).at[:P].set(flat_idx.astype(jnp.int32))

    feats_out, logits = pl.pallas_call(
        _gather_heads_kernel,
        out_shape=(jax.ShapeDtypeStruct((P_pad, F), jnp.float32),
                   jax.ShapeDtypeStruct((P_pad, CW), jnp.float32)),
        grid_spec=pltpu.PrefetchScalarGridSpec(
            num_scalar_prefetch=1,                       # flat indices -> SMEM
            grid=(P_pad // tp,),
            in_specs=[
                pl.BlockSpec(memory_space=pl.ANY),       # feature map stays in HBM
                pl.BlockSpec((F, CW), lambda t, idx: (0, 0)),
                pl.BlockSpec((1, CW), lambda t, idx: (0, 0)),
            ],
            out_specs=(
                pl.BlockSpec((tp, F), lambda t, idx: (t, 0)),
                pl.BlockSpec((tp, CW), lambda t, idx: (t, 0)),
            ),
            scratch_shapes=[
                pltpu.VMEM((tp, F), jnp.float32),
                pltpu.SemaphoreType.DMA((tp,)),
            ]),
        compiler_params=pltpu.CompilerParams(
            dimension_semantics=("parallel",),
            vmem_limit_bytes=32 * 1024 * 1024),
    )(idx_pad, feats_flat, w_heads_bf16, b_heads)
    return feats_out[:P], logits[:P]


# ----------------------------------------------------------------------------
# Net2DSeg forward (dual_head=True)
# ----------------------------------------------------------------------------
def net2dseg_forward(params, data_batch):
    img = data_batch["img"]                  # (N, 3, H, W)  NCHW, like PyTorch
    img_indices = data_batch["img_indices"]  # list of (P_i, 2) int32 [row, col]

    N, Cin, H, W = img.shape
    F = params["conv_w"].shape[1]
    C = params["lin1_w"].shape[1]

    img_nhwc = jnp.transpose(img, (0, 2, 3, 1))    # tiny (Cin=3) input transpose

    # Backbone stand-in (see TODO(synk) above).
    feats_flat, feats_nchw = conv3x3_relu_pallas(
        img_nhwc, params["conv_w"], params["conv_b"])
    feat_full = feats_nchw.reshape(N, F, H, W)      # bitcast reshape, no HBM copy

    # Flatten per-image (row, col) gathers into indices over (N*H*W) NHWC rows.
    flat_idx_list = []
    for i, idx_i in enumerate(img_indices):
        rows = idx_i[:, 0].astype(jnp.int32)
        cols = idx_i[:, 1].astype(jnp.int32)
        flat_idx_list.append(i * H * W + rows * W + cols)
    flat_idx = jnp.concatenate(flat_idx_list, axis=0)   # (P_total,)

    # Fuse the two heads into one lane-padded (F, >=128) weight / bias.
    CW = max(128, _round_up(2 * C, 128))
    w_heads = jnp.zeros((F, CW), jnp.float32)
    w_heads = w_heads.at[:, :C].set(params["lin1_w"])
    w_heads = w_heads.at[:, C:2 * C].set(params["lin2_w"])
    b_heads = jnp.zeros((1, CW), jnp.float32)
    b_heads = b_heads.at[:, :C].set(params["lin1_b"])
    b_heads = b_heads.at[:, C:2 * C].set(params["lin2_b"])

    img_feats, logits = gather_and_heads_pallas(
        flat_idx, feats_flat, w_heads.astype(jnp.bfloat16), b_heads)

    return {
        "feats_full": feat_full,            # (N, 64, H, W)
        "feats": img_feats,                 # (P_total, 64)
        "seg_logit": logits[:, :C],         # (P_total, num_classes)
        "seg_logit2": logits[:, C:2 * C],   # (P_total, num_classes) dual_head=True
    }


def init_params(key, num_classes=5, feat_channels=64, cin=3):
    k1, k2, k3, k4, k5 = jax.random.split(key, 5)
    # conv weight laid out (kh, kw, cin) flattened -> feat_channels (matches the
    # in-kernel im2col order).
    conv_w = jax.random.normal(k1, (9 * cin, feat_channels), jnp.float32) * 0.1
    conv_b = jax.random.normal(k2, (1, feat_channels), jnp.float32) * 0.1
    # PyTorch nn.Linear stores (out, in); we keep the (in, out) transpose for x @ W.
    lin1_w = jax.random.normal(k3, (feat_channels, num_classes), jnp.float32) * 0.1
    lin1_b = jnp.zeros((1, num_classes), jnp.float32)
    lin2_w = jax.random.normal(k4, (feat_channels, num_classes), jnp.float32) * 0.1
    lin2_b = jax.random.normal(k5, (1, num_classes), jnp.float32) * 0.1
    return {
        "conv_w": conv_w, "conv_b": conv_b,
        "lin1_w": lin1_w, "lin1_b": lin1_b,
        "lin2_w": lin2_w, "lin2_b": lin2_b,
    }


if __name__ == "__main__":
    key = jax.random.PRNGKey(0)
    k_img, k_idx, k_par = jax.random.split(key, 3)

    N, Cin, H, W = 2, 3, 16, 16
    P = 8                      # points per image
    num_classes = 5

    img = jax.random.normal(k_img, (N, Cin, H, W), jnp.float32)
    idx_keys = jax.random.split(k_idx, N)
    img_indices = [
        jax.random.randint(idx_keys[i], (P, 2), 0, H, dtype=jnp.int32) for i in range(N)
    ]

    params = init_params(k_par, num_classes=num_classes, feat_channels=64, cin=Cin)
    data_batch = {"img": img, "img_indices": img_indices}

    preds = net2dseg_forward(params, data_batch)
    jax.block_until_ready(preds)

    assert preds["feats_full"].shape == (N, 64, H, W)
    assert preds["feats"].shape == (N * P, 64)
    assert preds["seg_logit"].shape == (N * P, num_classes)
    assert preds["seg_logit2"].shape == (N * P, num_classes)
    print("KERNEL_OK")
</pallas_src>

<mosaic_0001>
module attributes {stable_mosaic.version = 11 : i64} {
  func.func @kernel(%arg0: i32, %arg1: i32, %arg2: memref<1x18x18x3xbf16, #tpu.memory_space<vmem>>, %arg3: memref<27x64xbf16, #tpu.memory_space<vmem>>, %arg4: memref<1x64xf32, #tpu.memory_space<vmem>>, %arg5: memref<256x64xf32, #tpu.memory_space<vmem>>, %arg6: memref<1x64x256xf32, #tpu.memory_space<vmem>>) attributes {dimension_semantics = [#tpu.dimension_semantics<parallel>, #tpu.dimension_semantics<parallel>], iteration_bounds = array<i64: 2, 1>, scalar_prefetch = 0 : i64, scratch_operands = 0 : i64, tpu.core_type = #tpu.core_type<tc>, window_params = [{transform_indices = @transform_0, window_bounds = array<i64: 1, 18, 18, 3>}, {pipeline_mode = #tpu.pipeline_mode<synchronous>, transform_indices = @transform_1, window_bounds = array<i64: 27, 64>}, {pipeline_mode = #tpu.pipeline_mode<synchronous>, transform_indices = @transform_2, window_bounds = array<i64: 1, 64>}, {transform_indices = @transform_3, window_bounds = array<i64: 256, 64>}, {transform_indices = @transform_4, window_bounds = array<i64: 1, 64, 256>}]} {
    %c16_i32 = arith.constant 16 : i32
    %0 = arith.muli %arg1, %c16_i32 : i32
    %1 = tpu.assume_multiple %0, 16 : i32
    %c0 = arith.constant 0 : index
    %2 = arith.index_cast %1 : i32 to index
    %c0_0 = arith.constant 0 : index
    %c0_1 = arith.constant 0 : index
    %3 = vector.load %arg2[%c0, %2, %c0_0, %c0_1] : memref<1x18x18x3xbf16, #tpu.memory_space<vmem>>, vector<1x18x18x3xbf16>
    %4 = vector.shape_cast %3 : vector<1x18x18x3xbf16> to vector<18x18x3xbf16>
    %5 = vector.extract_strided_slice %4 {offsets = [0, 0, 0], sizes = [16, 16, 3], strides = [1, 1, 1]} : vector<18x18x3xbf16> to vector<16x16x3xbf16>
    %6 = vector.extract_strided_slice %4 {offsets = [0, 1, 0], sizes = [16, 16, 3], strides = [1, 1, 1]} : vector<18x18x3xbf16> to vector<16x16x3xbf16>
    %7 = vector.extract_strided_slice %4 {offsets = [0, 2, 0], sizes = [16, 16, 3], strides = [1, 1, 1]} : vector<18x18x3xbf16> to vector<16x16x3xbf16>
    %8 = vector.extract_strided_slice %4 {offsets = [1, 0, 0], sizes = [16, 16, 3], strides = [1, 1, 1]} : vector<18x18x3xbf16> to vector<16x16x3xbf16>
    %9 = vector.extract_strided_slice %4 {offsets = [1, 1, 0], sizes = [16, 16, 3], strides = [1, 1, 1]} : vector<18x18x3xbf16> to vector<16x16x3xbf16>
    %10 = vector.extract_strided_slice %4 {offsets = [1, 2, 0], sizes = [16, 16, 3], strides = [1, 1, 1]} : vector<18x18x3xbf16> to vector<16x16x3xbf16>
    %11 = vector.extract_strided_slice %4 {offsets = [2, 0, 0], sizes = [16, 16, 3], strides = [1, 1, 1]} : vector<18x18x3xbf16> to vector<16x16x3xbf16>
    %12 = vector.extract_strided_slice %4 {offsets = [2, 1, 0], sizes = [16, 16, 3], strides = [1, 1, 1]} : vector<18x18x3xbf16> to vector<16x16x3xbf16>
    %13 = vector.extract_strided_slice %4 {offsets = [2, 2, 0], sizes = [16, 16, 3], strides = [1, 1, 1]} : vector<18x18x3xbf16> to vector<16x16x3xbf16>
    %14 = tpu.concatenate %5, %6, %7, %8, %9, %10, %11, %12, %13 in 2 : vector<16x16x3xbf16>, vector<16x16x3xbf16>, vector<16x16x3xbf16>, vector<16x16x3xbf16>, vector<16x16x3xbf16>, vector<16x16x3xbf16>, vector<16x16x3xbf16>, vector<16x16x3xbf16>, vector<16x16x3xbf16> -> vector<16x16x27xbf16>
    %15 = vector.shape_cast %14 : vector<16x16x27xbf16> to vector<256x27xbf16>
    %c0_2 = arith.constant 0 : index
    %c0_3 = arith.constant 0 : index
    %16 = vector.load %arg3[%c0_2, %c0_3] : memref<27x64xbf16, #tpu.memory_space<vmem>>, vector<27x64xbf16>
    %cst = arith.constant dense<0.000000e+00> : vector<256x64xf32>
    %17 = tpu.matmul %15, %16, %cst {dimension_numbers = #tpu.dot_dimension_numbers<[1], [0], [0], [1], [0, 0, 1, 1], [], []>} : vector<256x27xbf16>, vector<27x64xbf16>, vector<256x64xf32> -> vector<256x64xf32>
    %c0_4 = arith.constant 0 : index
    %c0_5 = arith.constant 0 : index
    %18 = vector.load %arg4[%c0_4, %c0_5] : memref<1x64xf32, #tpu.memory_space<vmem>>, vector<1x64xf32>
    %19 = vector.broadcast %18 : vector<1x64xf32> to vector<256x64xf32>
    %20 = arith.addf %17, %19 : vector<256x64xf32>
    %cst_6 = arith.constant 0.000000e+00 : f32
    %21 = vector.broadcast %cst_6 : f32 to vector<256x64xf32>
    %22 = arith.maximumf %20, %21 : vector<256x64xf32>
    %c0_7 = arith.constant 0 : index
    %c0_8 = arith.constant 0 : index
    %23 = vector.load %arg5[%c0_7, %c0_8] : memref<256x64xf32, #tpu.memory_space<vmem>>, vector<256x64xf32>
    tpu.vector_store %arg5[%c0_7, %c0_8], %22 {strides = array<i32>} : memref<256x64xf32, #tpu.memory_space<vmem>>, vector<256x64xf32>,
    %24 = tpu.transpose %22, [1, 0] : vector<256x64xf32> -> vector<64x256xf32>
    %25 = vector.shape_cast %24 : vector<64x256xf32> to vector<1x64x256xf32>
    %c0_9 = arith.constant 0 : index
    %c0_10 = arith.constant 0 : index
    %c0_11 = arith.constant 0 : index
    %26 = vector.load %arg6[%c0_9, %c0_10, %c0_11] : memref<1x64x256xf32, #tpu.memory_space<vmem>>, vector<1x64x256xf32>
    tpu.vector_store %arg6[%c0_9, %c0_10, %c0_11], %25 {strides = array<i32>} : memref<1x64x256xf32, #tpu.memory_space<vmem>>, vector<1x64x256xf32>,
    return
  }
  func.func @transform_0(%arg0: i32, %arg1: i32) -> (i32, i32, i32, i32) {
    %c0_i32 = arith.constant 0 : i32
    %c0_i32_0 = arith.constant 0 : i32
    %c0_i32_1 = arith.constant 0 : i32
    %c0_i32_2 = arith.constant 0 : i32
    return %arg0, %c0_i32, %c0_i32_0, %c0_i32_1 : i32, i32, i32, i32
  }
  func.func @transform_1(%arg0: i32, %arg1: i32) -> (i32, i32) {
    %c0_i32 = arith.constant 0 : i32
    %c0_i32_0 = arith.constant 0 : i32
    %c0_i32_1 = arith.constant 0 : i32
    return %c0_i32, %c0_i32_0 : i32, i32
  }
  func.func @transform_2(%arg0: i32, %arg1: i32) -> (i32, i32) {
    %c0_i32 = arith.constant 0 : i32
    %c0_i32_0 = arith.constant 0 : i32
    %c0_i32_1 = arith.constant 0 : i32
    return %c0_i32, %c0_i32_0 : i32, i32
  }
  func.func @transform_3(%arg0: i32, %arg1: i32) -> (i32, i32) {
    %c1_i32 = arith.constant 1 : i32
    %0 = arith.muli %arg0, %c1_i32 : i32
    %1 = arith.addi %0, %arg1 : i32
    %c0_i32 = arith.constant 0 : i32
    %c0_i32_0 = arith.constant 0 : i32
    return %1, %c0_i32 : i32, i32
  }
  func.func @transform_4(%arg0: i32, %arg1: i32) -> (i32, i32, i32) {
    %c0_i32 = arith.constant 0 : i32
    %c0_i32_0 = arith.constant 0 : i32
    return %arg0, %c0_i32, %arg1 : i32, i32, i32
  }
}

</mosaic_0001>

<llo_original>
// kernel: tpu_custom_call.1
$region0: #{tpu_custom_call.1}
  #allocation0 [shape = 'u32[]', space=smem, size = 0x4, offset = 0x4, fixed_abs, tag = 'smem constant byte address 0x4 - core index']
  #allocation1 [shape = 'u32[144,128]{1,0:T(1,128)}', space=vmem, size = 0x12000, scoped, tag = 'internal scratch']
  %s0 = inlined_call_operand.vmem [shape: bf16[2,18,18,3], index: 0, kind: input, shape index: {}]
  %s1 = inlined_call_operand.vmem [shape: bf16[27,64], index: 1, kind: input, shape index: {}]
  %s2 = inlined_call_operand.vmem [shape: f32[1,64], index: 2, kind: input, shape index: {}]
  %s3 = inlined_call_operand.vmem [shape: f32[512,64], index: 3, kind: output, shape index: {0}]
  %s4 = inlined_call_operand.hbm [shape: f32[2,64,256], index: 4, kind: output, shape index: {1}]
  %5 = xla_tuple %s3, %s4
  %s6 = sld [smem:[#allocation0]]
  $region53: #{tpu_custom_call.1} parent=0
    _
  %s8 = ssub.s32 1, %s6
  %s9 = scalar_select 0, %s8, %s6
  $region1: #{tpu_custom_call.1} parent=0
    #allocation2 [shape = 'u8[131072]{0}', space=vmem, size = 0x20000, scoped, tag = 'output window, operand 1']
    #allocation3 [shape = 's32[2]{0}', space=sflag, size = 0x8, scoped, tag = 'scoped memory for tpu_custom_call.1']
    %10 = vsyncpa [#allocation3], 0
    %s11 = scalar_lea.sflag [#allocation3], 1
    %12 = vsyncpa %s11, 0
    loop: start=0, step=1, limit=4
    $region2: #{tpu_custom_call.1} parent=1 // loop_pre_header
      _
    $region3: #{tpu_custom_call.1} parent=1 // loop_header
      %s14 = sphi 0, %s18
      %p15 = scmp.ge.s32.totalorder %s14, 4
      %s21 = sphi 0, %s33
      %s22 = sphi 0, %s29
      %s23 = sphi 0, %s21
      %s24 = sphi 0, %s22
      %s25 = sphi 0, %s23
      %s26 = sphi 0, %s24
      %s36 = sphi 0, %s38
      %s39 = sphi 0, %s36
      %s40 = sphi 0, %s39
      %s56 = sphi 0, %s40
      %s60 = sphi 0, %s60
      %s62 = sphi 0, %s60
      %s63 = sphi 0, %s62
      %s77 = sphi 0, %s63
      %s81 = sphi 0, %s81
      %s83 = sphi 0, %s81
      %s84 = sphi 0, %s83
      %s98 = sphi 0, %s84
      %s106 = sphi 0, %s108
      %s109 = sphi 0, %s106
      %s110 = sphi 0, %s109
      %s126 = sphi 0, %s110
      %s134 = sphi 0, %s136
      %s137 = sphi 0, %s134
      %s138 = sphi 0, %s137
      %s154 = sphi 0, %s138
    $region4: #{tpu_custom_call.1} parent=1 // loop_header_branch
      %17 = sbr.rel (%p15) target = $region8
    $region5: #{tpu_custom_call.1} parent=1 // loop_body
      %s19 = ssub.s32 %s14, 1
      %s20 = ssub.s32 %s14, 2
      %s27 = sadd.s32 1, %s22
      %p28 = scmp.ge.s32.totalorder %s27, 1
      %s29 = scalar_select %p28, 0, %s27
      %s30 = sadd.s32 1, %s21
      %s31 = scalar_select %p28, %s30, %s21
      %p32 = scmp.ge.s32.totalorder %s31, 2
      %s33 = scalar_select %p32, 0, %s31
      %s34 = ssub.s32 %s21, %s33
      %p35 = scmp.eq.s32.totalorder %s34, 0
      %s37 = sadd.s32 %s36, 1
      %s38 = scalar_select %p35, %s36, %s37
      %p41 = pneg %p35
      %p42 = scmp.eq.s32.totalorder %s14, 1
      %p43 = por %p41, %p42
      %p44 = scmp.ne.s32.totalorder %s36, %s39
      %p45 = scmp.eq.s32.totalorder %s14, 0
      %p46 = por %p44, %p45
      %p47 = scmp.ne.s32.totalorder %s36, %s39
      %p48 = scmp.eq.s32.totalorder %s19, 1
      %p49 = por %p47, %p48
      %p50 = scmp.ne.s32.totalorder %s39, %s40
      %p51 = scmp.eq.s32.totalorder %s19, 0
      %p52 = por %p50, %p51
      %p53 = scmp.ne.s32.totalorder %s39, %s40
      %p54 = scmp.eq.s32.totalorder %s20, 1
      %p55 = por %p53, %p54
      %p57 = scmp.ne.s32.totalorder %s40, %s56
      %p58 = scmp.eq.s32.totalorder %s20, 0
      %p59 = por %p57, %p58
      %s61 = sadd.s32 %s60, 1
      %p64 = scmp.eq.s32.totalorder %s14, 1
      %p65 = scmp.ne.s32.totalorder %s60, %s62
      %p66 = scmp.eq.s32.totalorder %s14, 0
      %p67 = por %p65, %p66
      %p68 = scmp.ne.s32.totalorder %s60, %s62
      %p69 = scmp.eq.s32.totalorder %s19, 1
      %p70 = por %p68, %p69
      %p71 = scmp.ne.s32.totalorder %s62, %s63
      %p72 = scmp.eq.s32.totalorder %s19, 0
      %p73 = por %p71, %p72
      %p74 = scmp.ne.s32.totalorder %s62, %s63
      %p75 = scmp.eq.s32.totalorder %s20, 1
      %p76 = por %p74, %p75
      %p78 = scmp.ne.s32.totalorder %s63, %s77
      %p79 = scmp.eq.s32.totalorder %s20, 0
      %p80 = por %p78, %p79
      %s82 = sadd.s32 %s81, 1
      %p85 = scmp.eq.s32.totalorder %s14, 1
      %p86 = scmp.ne.s32.totalorder %s81, %s83
      %p87 = scmp.eq.s32.totalorder %s14, 0
      %p88 = por %p86, %p87
      %p89 = scmp.ne.s32.totalorder %s81, %s83
      %p90 = scmp.eq.s32.totalorder %s19, 1
      %p91 = por %p89, %p90
      %p92 = scmp.ne.s32.totalorder %s83, %s84
      %p93 = scmp.eq.s32.totalorder %s19, 0
      %p94 = por %p92, %p93
      %p95 = scmp.ne.s32.totalorder %s83, %s84
      %p96 = scmp.eq.s32.totalorder %s20, 1
      %p97 = por %p95, %p96
      %p99 = scmp.ne.s32.totalorder %s84, %s98
      %p100 = scmp.eq.s32.totalorder %s20, 0
      %p101 = por %p99, %p100
      %s102 = sadd.s32 %s21, %s22
      %s103 = sadd.s32 %s33, %s29
      %s104 = ssub.s32 %s102, %s103
      %p105 = scmp.eq.s32.totalorder %s104, 0
      %s107 = sadd.s32 %s106, 1
      %s108 = scalar_select %p105, %s106, %s107
      %p111 = pneg %p105
      %p112 = scmp.eq.s32.totalorder %s14, 1
      %p113 = por %p111, %p112
      %p114 = scmp.ne.s32.totalorder %s106, %s109
      %p115 = scmp.eq.s32.totalorder %s14, 0
      %p116 = por %p114, %p115
      %p117 = scmp.ne.s32.totalorder %s106, %s109
      %p118 = scmp.eq.s32.totalorder %s19, 1
      %p119 = por %p117, %p118
      %p120 = scmp.ne.s32.totalorder %s109, %s110
      %p121 = scmp.eq.s32.totalorder %s19, 0
      %p122 = por %p120, %p121
      %p123 = scmp.ne.s32.totalorder %s109, %s110
      %p124 = scmp.eq.s32.totalorder %s20, 1
      %p125 = por %p123, %p124
      %p127 = scmp.ne.s32.totalorder %s110, %s126
      %p128 = scmp.eq.s32.totalorder %s20, 0
      %p129 = por %p127, %p128
      %s130 = ssub.s32 %s21, %s33
      %s131 = ssub.s32 %s22, %s29
      %s132 = sor.u32 %s130, %s131
      %p133 = scmp.eq.s32.totalorder %s132, 0
      %s135 = sadd.s32 %s134, 1
      %s136 = scalar_select %p133, %s134, %s135
      %p139 = pneg %p133
      %p140 = scmp.eq.s32.totalorder %s14, 1
      %p141 = por %p139, %p140
      %p142 = scmp.ne.s32.totalorder %s134, %s137
      %p143 = scmp.eq.s32.totalorder %s14, 0
      %p144 = por %p142, %p143
      %p145 = scmp.ne.s32.totalorder %s134, %s137
      %p146 = scmp.eq.s32.totalorder %s19, 1
      %p147 = por %p145, %p146
      %p148 = scmp.ne.s32.totalorder %s137, %s138
      %p149 = scmp.eq.s32.totalorder %s19, 0
      %p150 = por %p148, %p149
      %p151 = scmp.ne.s32.totalorder %s137, %s138
      %p152 = scmp.eq.s32.totalorder %s20, 1
      %p153 = por %p151, %p152
      %p155 = scmp.ne.s32.totalorder %s138, %s154
      %p156 = scmp.eq.s32.totalorder %s20, 0
      %p157 = por %p155, %p156
      %p158 = scmp.le.s32.totalorder 1, %s14
      %p159 = scmp.lt.s32.totalorder %s14, 3
      %p160 = pnand %p158, %p159
      %p161 = pneg %p160
      // Predicated region
      $region9: #{tpu_custom_call.1} parent=5 // pred_check
        _
      $region10: #{tpu_custom_call.1} parent=5 // pred_check_branch
        %163 = sbr.rel (%p160) target = $region12
      $region11: #{tpu_custom_call.1} parent=5 // pred_region
        %s164 = ssub.s32 %s14, 1
        // Predicated region
        $region13: #{tpu_custom_call.1} parent=11 // pred_check
          %p165 = pneg %p73
        $region14: #{tpu_custom_call.1} parent=11 // pred_check_branch
          %167 = sbr.rel (%p165) target = $region16
        $region15: #{tpu_custom_call.1} parent=11 // pred_region
          _
        $region16: #{tpu_custom_call.1} parent=11 // pred_fallthru
          _
        // Predicated region
        $region17: #{tpu_custom_call.1} parent=11 // pred_check
          %p168 = pneg %p94
        $region18: #{tpu_custom_call.1} parent=11 // pred_check_branch
          %170 = sbr.rel (%p168) target = $region20
        $region19: #{tpu_custom_call.1} parent=11 // pred_region
          _
        $region20: #{tpu_custom_call.1} parent=11 // pred_fallthru
          _
      $region12: #{tpu_custom_call.1} parent=5 // pred_fallthru
        _
      %p171 = scmp.lt.s32.totalorder %s14, 2
      // Predicated region
      $region21: #{tpu_custom_call.1} parent=5 // pred_check
        %p172 = pneg %p171
      $region22: #{tpu_custom_call.1} parent=5 // pred_check_branch
        %174 = sbr.rel (%p172) target = $region24
      $region23: #{tpu_custom_call.1} parent=5 // pred_region
        // Predicated region
        $region25: #{tpu_custom_call.1} parent=23 // pred_check
          %p175 = pneg %p46
        $region26: #{tpu_custom_call.1} parent=23 // pred_check_branch
          %177 = sbr.rel (%p175) target = $region28
        $region27: #{tpu_custom_call.1} parent=23 // pred_region
          %p178 = scmp.lt.s32.totalorder %s21, 1
          %s179 = scalar_select %p178, %s21, 1
          %s180 = smul.addr %s179, 54
          %s181 = smul.addr %s180, 4
          %s182 = scalar_lea.vmem %s0, %s181
        $region28: #{tpu_custom_call.1} parent=23 // pred_fallthru
          _
      $region24: #{tpu_custom_call.1} parent=5 // pred_fallthru
        _
      %p183 = scmp.le.s32.totalorder 1, %s14
      %p184 = scmp.lt.s32.totalorder %s14, 3
      %p185 = pnand %p183, %p184
      %p186 = pneg %p185
      // Predicated region
      $region29: #{tpu_custom_call.1} parent=5 // pred_check
        _
      $region30: #{tpu_custom_call.1} parent=5 // pred_check_branch
        %188 = sbr.rel (%p185) target = $region32
      $region31: #{tpu_custom_call.1} parent=5 // pred_region
        %s189 = ssub.s32 %s14, 1
        %p190 = scmp.lt.s32.totalorder %s23, 1
        %s191 = scalar_select %p190, %s23, 1
        %s192 = smul.addr %s191, 54
        %s193 = smul.addr %s192, 4
        %s194 = scalar_lea.vmem %s0, %s193
        %p195 = pneg %p52
        %p196 = pneg %p49
        %p197 = pneg %p73
        %p198 = pneg %p70
        %p199 = pneg %p94
        %p200 = pneg %p91
        %p201 = pneg %p122
        %p202 = pneg %p119
        %s203 = sadd.s32 %s23, %s24
        %s204 = smul.u32 32, %s203
        %p205 = scmp.lt.s32.totalorder %s204, 63
        %s206 = scalar_select %p205, %s204, 63
        %s207 = smul.addr %s206, 8
        %s208 = scalar_lea.vmem %s3, %s207
        %p209 = pneg %p150
        %p210 = pneg %p147
        %s211 = sand.u32 %s137, 1
        %s212 = scalar_lea.sflag [#allocation3], %s211
        %s213 = sand.u32 %s137, 1
        %s214 = smul.addr %s213, 128
        %s215 = scalar_lea.vmem [#allocation2], %s214
        %p216 = scmp.lt.s32.totalorder %s23, 1
        %s217 = scalar_select %p216, %s23, 1
        %s218 = smul.addr %s217, 54
        %s219 = smul.addr %s218, 4
        %s220 = scalar_lea.vmem %s0, %s219
        %s221 = sadd.s32 %s23, %s24
        %s222 = smul.u32 32, %s221
        %p223 = scmp.lt.s32.totalorder %s222, 63
        %s224 = scalar_select %p223, %s222, 63
        %s225 = smul.addr %s224, 8
        %s226 = scalar_lea.vmem %s3, %s225
        %s227 = sadd.s32 %s23, %s24
        %s228 = smul.u32 32, %s227
        %s229 = smul.u32 2, %s24
        %s231 = smul.u32 %s24, 16
        %s232 = smul.u32 %s231, 3
        %s233 = smul.addr %s232, 4
        %s234 = scalar_lea.vmem %s220, %s233
        %v235 = vld [vmem:[%s234] sm:$0xf]
        %v236 = vld [vmem:[%s234 + $0x4] sm:$0xf]
        %v237 = vld [vmem:[%s234 + $0x8] sm:$0x1]
        %v238 = vld [vmem:[%s234 + $0xc] sm:$0xf]
        %v239 = vld [vmem:[%s234 + $0x10] sm:$0xf]
        %v240 = vld [vmem:[%s234 + $0x14] sm:$0x1]
        %v241 = vld [vmem:[%s234 + $0x18] sm:$0xf]
        %v242 = vld [vmem:[%s234 + $0x1c] sm:$0xf]
        %v243 = vld [vmem:[%s234 + $0x20] sm:$0x1]
        %v244 = vld [vmem:[%s234 + $0x24] sm:$0xf]
        %v245 = vld [vmem:[%s234 + $0x28] sm:$0xf]
        %v246 = vld [vmem:[%s234 + $0x2c] sm:$0x1]
        %v247 = vld [vmem:[%s234 + $0x30] sm:$0xf]
        %v248 = vld [vmem:[%s234 + $0x34] sm:$0xf]
        %v249 = vld [vmem:[%s234 + $0x38] sm:$0x1]
        %v250 = vld [vmem:[%s234 + $0x3c] sm:$0xf]
        %v251 = vld [vmem:[%s234 + $0x40] sm:$0xf]
        %v252 = vld [vmem:[%s234 + $0x44] sm:$0x1]
        %v253 = vld [vmem:[%s234 + $0x48] sm:$0xf]
        %v254 = vld [vmem:[%s234 + $0x4c] sm:$0xf]
        %v255 = vld [vmem:[%s234 + $0x50] sm:$0x1]
        %v256 = vld [vmem:[%s234 + $0x54] sm:$0xf]
        %v257 = vld [vmem:[%s234 + $0x58] sm:$0xf]
        %v258 = vld [vmem:[%s234 + $0x5c] sm:$0x1]
        %v259 = vld [vmem:[%s234 + $0x60] sm:$0xf]
        %v260 = vld [vmem:[%s234 + $0x64] sm:$0xf]
        %v261 = vld [vmem:[%s234 + $0x68] sm:$0x1]
        %v262 = vld [vmem:[%s234 + $0x6c] sm:$0xf]
        %v263 = vld [vmem:[%s234 + $0x70] sm:$0xf]
        %v264 = vld [vmem:[%s234 + $0x74] sm:$0x1]
        %v265 = vld [vmem:[%s234 + $0x78] sm:$0xf]
        %v266 = vld [vmem:[%s234 + $0x7c] sm:$0xf]
        %v267 = vld [vmem:[%s234 + $0x80] sm:$0x1]
        %v268 = vld [vmem:[%s234 + $0x84] sm:$0xf]
        %v269 = vld [vmem:[%s234 + $0x88] sm:$0xf]
        %v270 = vld [vmem:[%s234 + $0x8c] sm:$0x1]
        %v271 = vld [vmem:[%s234 + $0x90] sm:$0xf]
        %v272 = vld [vmem:[%s234 + $0x94] sm:$0xf]
        %v273 = vld [vmem:[%s234 + $0x98] sm:$0x1]
        %v274 = vld [vmem:[%s234 + $0x9c] sm:$0xf]
        %v275 = vld [vmem:[%s234 + $0xa0] sm:$0xf]
        %v276 = vld [vmem:[%s234 + $0xa4] sm:$0x1]
        %v277 = vld [vmem:[%s234 + $0xa8] sm:$0xf]
        %v278 = vld [vmem:[%s234 + $0xac] sm:$0xf]
        %v279 = vld [vmem:[%s234 + $0xb0] sm:$0x1]
        %v280 = vld [vmem:[%s234 + $0xb4] sm:$0xf]
        %v281 = vld [vmem:[%s234 + $0xb8] sm:$0xf]
        %v282 = vld [vmem:[%s234 + $0xbc] sm:$0x1]
        %v283 = vld [vmem:[%s234 + $0xc0] sm:$0xf]
        %v284 = vld [vmem:[%s234 + $0xc4] sm:$0xf]
        %v285 = vld [vmem:[%s234 + $0xc8] sm:$0x1]
        %v286 = vld [vmem:[%s234 + $0xcc] sm:$0xf]
        %v287 = vld [vmem:[%s234 + $0xd0] sm:$0xf]
        %v288 = vld [vmem:[%s234 + $0xd4] sm:$0x1]
        %v321 = vunpack.c.l.b16 %v235
        %v322 = vunpack.c.l.b16 %v236
        %v323 = vunpack.c.l.b16 %v238
        %v324 = vunpack.c.l.b16 %v239
        %v325 = vunpack.c.l.b16 %v241
        %v326 = vunpack.c.l.b16 %v242
        %v327 = vunpack.c.l.b16 %v244
        %v328 = vunpack.c.l.b16 %v245
        %v329 = vunpack.c.l.b16 %v247
        %v330 = vunpack.c.l.b16 %v248
        %v331 = vunpack.c.l.b16 %v250
        %v332 = vunpack.c.l.b16 %v251
        %v333 = vunpack.c.l.b16 %v253
        %v334 = vunpack.c.l.b16 %v254
        %v335 = vunpack.c.l.b16 %v256
        %v336 = vunpack.c.l.b16 %v257
        %v337 = vunpack.c.l.b16 %v259
        %v338 = vunpack.c.l.b16 %v260
        %v339 = vunpack.c.l.b16 %v262
        %v340 = vunpack.c.l.b16 %v263
        %v341 = vunpack.c.l.b16 %v265
        %v342 = vunpack.c.l.b16 %v266
        %v343 = vunpack.c.l.b16 %v268
        %v344 = vunpack.c.l.b16 %v269
        %v345 = vunpack.c.l.b16 %v271
        %v346 = vunpack.c.l.b16 %v272
        %v347 = vunpack.c.l.b16 %v274
        %v348 = vunpack.c.l.b16 %v275
        %v349 = vunpack.c.l.b16 %v277
        %v350 = vunpack.c.l.b16 %v278
        %v351 = vunpack.c.l.b16 %v280
        %v352 = vunpack.c.l.b16 %v281
        %v353 = vpack.c.b16 %v322, %v321
        %v354 = vpack.c.b16 %v324, %v323
        %v355 = vpack.c.b16 %v326, %v325
        %v356 = vpack.c.b16 %v328, %v327
        %v357 = vpack.c.b16 %v330, %v329
        %v358 = vpack.c.b16 %v332, %v331
        %v359 = vpack.c.b16 %v334, %v333
        %v360 = vpack.c.b16 %v336, %v335
        %v361 = vpack.c.b16 %v338, %v337
        %v362 = vpack.c.b16 %v340, %v339
        %v363 = vpack.c.b16 %v342, %v341
        %v364 = vpack.c.b16 %v344, %v343
        %v365 = vpack.c.b16 %v346, %v345
        %v366 = vpack.c.b16 %v348, %v347
        %v367 = vpack.c.b16 %v350, %v349
        %v368 = vpack.c.b16 %v352, %v351
        %v385 = vunpack.c.l.b16 %v237
        %v386 = vunpack.c.l.b16 %v240
        %v387 = vunpack.c.l.b16 %v243
        %v388 = vunpack.c.l.b16 %v246
        %v389 = vunpack.c.l.b16 %v249
        %v390 = vunpack.c.l.b16 %v252
        %v391 = vunpack.c.l.b16 %v255
        %v392 = vunpack.c.l.b16 %v258
        %v393 = vunpack.c.l.b16 %v261
        %v394 = vunpack.c.l.b16 %v264
        %v395 = vunpack.c.l.b16 %v267
        %v396 = vunpack.c.l.b16 %v270
        %v397 = vunpack.c.l.b16 %v273
        %v398 = vunpack.c.l.b16 %v276
        %v399 = vunpack.c.l.b16 %v279
        %v400 = vunpack.c.l.b16 %v282
        %v401 = vpack.c.b16 %v385, %v385
        %v402 = vpack.c.b16 %v386, %v386
        %v403 = vpack.c.b16 %v387, %v387
        %v404 = vpack.c.b16 %v388, %v388
        %v405 = vpack.c.b16 %v389, %v389
        %v406 = vpack.c.b16 %v390, %v390
        %v407 = vpack.c.b16 %v391, %v391
        %v408 = vpack.c.b16 %v392, %v392
        %v409 = vpack.c.b16 %v393, %v393
        %v410 = vpack.c.b16 %v394, %v394
        %v411 = vpack.c.b16 %v395, %v395
        %v412 = vpack.c.b16 %v396, %v396
        %v413 = vpack.c.b16 %v397, %v397
        %v414 = vpack.c.b16 %v398, %v398
        %v415 = vpack.c.b16 %v399, %v399
        %v416 = vpack.c.b16 %v400, %v400
        %vm417 = vsmask.f32 7424
        %v419 = vshrl.u32 %v353, 16
        %v421 = vshll.u32 %v353, 16
        %v423 = vrot.slane %v421, 1
        %v424 = vor.u32 %v419, %v423
        %v426 = vshll.u32 %v401, 16
        %v428 = vrot.slane %v426, 1
        %v429 = vsel %vm417, %v424, %v428
        %v431 = vshrl.u32 %v354, 16
        %v433 = vshll.u32 %v354, 16
        %v435 = vrot.slane %v433, 1
        %v436 = vor.u32 %v431, %v435
        %v438 = vshll.u32 %v402, 16
        %v440 = vrot.slane %v438, 1
        %v441 = vsel %vm417, %v436, %v440
        %v443 = vshrl.u32 %v355, 16
        %v445 = vshll.u32 %v355, 16
        %v447 = vrot.slane %v445, 1
        %v448 = vor.u32 %v443, %v447
        %v450 = vshll.u32 %v403, 16
        %v452 = vrot.slane %v450, 1
        %v453 = vsel %vm417, %v448, %v452
        %v455 = vshrl.u32 %v356, 16
        %v457 = vshll.u32 %v356, 16
        %v459 = vrot.slane %v457, 1
        %v460 = vor.u32 %v455, %v459
        %v462 = vshll.u32 %v404, 16
        %v464 = vrot.slane %v462, 1
        %v465 = vsel %vm417, %v460, %v464
        %v467 = vshrl.u32 %v357, 16
        %v469 = vshll.u32 %v357, 16
        %v471 = vrot.slane %v469, 1
        %v472 = vor.u32 %v467, %v471
        %v474 = vshll.u32 %v405, 16
        %v476 = vrot.slane %v474, 1
        %v477 = vsel %vm417, %v472, %v476
        %v479 = vshrl.u32 %v358, 16
        %v481 = vshll.u32 %v358, 16
        %v483 = vrot.slane %v481, 1
        %v484 = vor.u32 %v479, %v483
        %v486 = vshll.u32 %v406, 16
        %v488 = vrot.slane %v486, 1
        %v489 = vsel %vm417, %v484, %v488
        %v491 = vshrl.u32 %v359, 16
        %v493 = vshll.u32 %v359, 16
        %v495 = vrot.slane %v493, 1
        %v496 = vor.u32 %v491, %v495
        %v498 = vshll.u32 %v407, 16
        %v500 = vrot.slane %v498, 1
        %v501 = vsel %vm417, %v496, %v500
        %v503 = vshrl.u32 %v360, 16
        %v505 = vshll.u32 %v360, 16
        %v507 = vrot.slane %v505, 1
        %v508 = vor.u32 %v503, %v507
        %v510 = vshll.u32 %v408, 16
        %v512 = vrot.slane %v510, 1
        %v513 = vsel %vm417, %v508, %v512
        %v515 = vshrl.u32 %v361, 16
        %v517 = vshll.u32 %v361, 16
        %v519 = vrot.slane %v517, 1
        %v520 = vor.u32 %v515, %v519
        %v522 = vshll.u32 %v409, 16
        %v524 = vrot.slane %v522, 1
        %v525 = vsel %vm417, %v520, %v524
        %v527 = vshrl.u32 %v362, 16
        %v529 = vshll.u32 %v362, 16
        %v531 = vrot.slane %v529, 1
        %v532 = vor.u32 %v527, %v531
        %v534 = vshll.u32 %v410, 16
        %v536 = vrot.slane %v534, 1
        %v537 = vsel %vm417, %v532, %v536
        %v539 = vshrl.u32 %v363, 16
        %v541 = vshll.u32 %v363, 16
        %v543 = vrot.slane %v541, 1
        %v544 = vor.u32 %v539, %v543
        %v546 = vshll.u32 %v411, 16
        %v548 = vrot.slane %v546, 1
        %v549 = vsel %vm417, %v544, %v548
        %v551 = vshrl.u32 %v364, 16
        %v553 = vshll.u32 %v364, 16
        %v555 = vrot.slane %v553, 1
        %v556 = vor.u32 %v551, %v555
        %v558 = vshll.u32 %v412, 16
        %v560 = vrot.slane %v558, 1
        %v561 = vsel %vm417, %v556, %v560
        %v563 = vshrl.u32 %v365, 16
        %v565 = vshll.u32 %v365, 16
        %v567 = vrot.slane %v565, 1
        %v568 = vor.u32 %v563, %v567
        %v570 = vshll.u32 %v413, 16
        %v572 = vrot.slane %v570, 1
        %v573 = vsel %vm417, %v568, %v572
        %v575 = vshrl.u32 %v366, 16
        %v577 = vshll.u32 %v366, 16
        %v579 = vrot.slane %v577, 1
        %v580 = vor.u32 %v575, %v579
        %v582 = vshll.u32 %v414, 16
        %v584 = vrot.slane %v582, 1
        %v585 = vsel %vm417, %v580, %v584
        %v587 = vshrl.u32 %v367, 16
        %v589 = vshll.u32 %v367, 16
        %v591 = vrot.slane %v589, 1
        %v592 = vor.u32 %v587, %v591
        %v594 = vshll.u32 %v415, 16
        %v596 = vrot.slane %v594, 1
        %v597 = vsel %vm417, %v592, %v596
        %v599 = vshrl.u32 %v368, 16
        %v601 = vshll.u32 %v368, 16
        %v603 = vrot.slane %v601, 1
        %v604 = vor.u32 %v599, %v603
        %v606 = vshll.u32 %v416, 16
        %v608 = vrot.slane %v606, 1
        %v609 = vsel %vm417, %v604, %v608
        %610 = vrot.lane.b32.xlu0 %v429, 3
        %v611 = vpop.permute.xlu0 %610
        %612 = vrot.lane.b32.xlu0 %v441, 3
        %v613 = vpop.permute.xlu0 %612
        %614 = vrot.lane.b32.xlu0 %v453, 3
        %v615 = vpop.permute.xlu0 %614
        %616 = vrot.lane.b32.xlu0 %v465, 3
        %v617 = vpop.permute.xlu0 %616
        %618 = vrot.lane.b32.xlu0 %v477, 3
        %v619 = vpop.permute.xlu0 %618
        %620 = vrot.lane.b32.xlu0 %v489, 3
        %v621 = vpop.permute.xlu0 %620
        %622 = vrot.lane.b32.xlu0 %v501, 3
        %v623 = vpop.permute.xlu0 %622
        %624 = vrot.lane.b32.xlu0 %v513, 3
        %v625 = vpop.permute.xlu0 %624
        %626 = vrot.lane.b32.xlu0 %v525, 3
        %v627 = vpop.permute.xlu0 %626
        %628 = vrot.lane.b32.xlu0 %v537, 3
        %v629 = vpop.permute.xlu0 %628
        %630 = vrot.lane.b32.xlu0 %v549, 3
        %v631 = vpop.permute.xlu0 %630
        %632 = vrot.lane.b32.xlu0 %v561, 3
        %v633 = vpop.permute.xlu0 %632
        %634 = vrot.lane.b32.xlu0 %v573, 3
        %v635 = vpop.permute.xlu0 %634
        %636 = vrot.lane.b32.xlu0 %v585, 3
        %v637 = vpop.permute.xlu0 %636
        %638 = vrot.lane.b32.xlu0 %v597, 3
        %v639 = vpop.permute.xlu0 %638
        %640 = vrot.lane.b32.xlu0 %v609, 3
        %v641 = vpop.permute.xlu0 %640
        %vm642 = vcmask 1046528
        %v643 = vrot.slane %v353, 1
        %v644 = vrot.slane %v401, 1
        %v645 = vsel %vm642, %v643, %v644
        %v646 = vrot.slane %v354, 1
        %v647 = vrot.slane %v402, 1
        %v648 = vsel %vm642, %v646, %v647
        %v649 = vrot.slane %v355, 1
        %v650 = vrot.slane %v403, 1
        %v651 = vsel %vm642, %v649, %v650
        %v652 = vrot.slane %v356, 1
        %v653 = vrot.slane %v404, 1
        %v654 = vsel %vm642, %v652, %v653
        %v655 = vrot.slane %v357, 1
        %v656 = vrot.slane %v405, 1
        %v657 = vsel %vm642, %v655, %v656
        %v658 = vrot.slane %v358, 1
        %v659 = vrot.slane %v406, 1
        %v660 = vsel %vm642, %v658, %v659
        %v661 = vrot.slane %v359, 1
        %v662 = vrot.slane %v407, 1
        %v663 = vsel %vm642, %v661, %v662
        %v664 = vrot.slane %v360, 1
        %v665 = vrot.slane %v408, 1
        %v666 = vsel %vm642, %v664, %v665
        %v667 = vrot.slane %v361, 1
        %v668 = vrot.slane %v409, 1
        %v669 = vsel %vm642, %v667, %v668
        %v670 = vrot.slane %v362, 1
        %v671 = vrot.slane %v410, 1
        %v672 = vsel %vm642, %v670, %v671
        %v673 = vrot.slane %v363, 1
        %v674 = vrot.slane %v411, 1
        %v675 = vsel %vm642, %v673, %v674
        %v676 = vrot.slane %v364, 1
        %v677 = vrot.slane %v412, 1
        %v678 = vsel %vm642, %v676, %v677
        %v679 = vrot.slane %v365, 1
        %v680 = vrot.slane %v413, 1
        %v681 = vsel %vm642, %v679, %v680
        %v682 = vrot.slane %v366, 1
        %v683 = vrot.slane %v414, 1
        %v684 = vsel %vm642, %v682, %v683
        %v685 = vrot.slane %v367, 1
        %v686 = vrot.slane %v415, 1
        %v687 = vsel %vm642, %v685, %v686
        %v688 = vrot.slane %v368, 1
        %v689 = vrot.slane %v416, 1
        %v690 = vsel %vm642, %v688, %v689
        %691 = vrot.lane.b32.xlu0 %v645, 6
        %v692 = vpop.permute.xlu0 %691
        %693 = vrot.lane.b32.xlu0 %v648, 6
        %v694 = vpop.permute.xlu0 %693
        %695 = vrot.lane.b32.xlu0 %v651, 6
        %v696 = vpop.permute.xlu0 %695
        %697 = vrot.lane.b32.xlu0 %v654, 6
        %v698 = vpop.permute.xlu0 %697
        %699 = vrot.lane.b32.xlu0 %v657, 6
        %v700 = vpop.permute.xlu0 %699
        %701 = vrot.lane.b32.xlu0 %v660, 6
        %v702 = vpop.permute.xlu0 %701
        %703 = vrot.lane.b32.xlu0 %v663, 6
        %v704 = vpop.permute.xlu0 %703
        %705 = vrot.lane.b32.xlu0 %v666, 6
        %v706 = vpop.permute.xlu0 %705
        %707 = vrot.lane.b32.xlu0 %v669, 6
        %v708 = vpop.permute.xlu0 %707
        %709 = vrot.lane.b32.xlu0 %v672, 6
        %v710 = vpop.permute.xlu0 %709
        %711 = vrot.lane.b32.xlu0 %v675, 6
        %v712 = vpop.permute.xlu0 %711
        %713 = vrot.lane.b32.xlu0 %v678, 6
        %v714 = vpop.permute.xlu0 %713
        %715 = vrot.lane.b32.xlu0 %v681, 6
        %v716 = vpop.permute.xlu0 %715
        %717 = vrot.lane.b32.xlu0 %v684, 6
        %v718 = vpop.permute.xlu0 %717
        %719 = vrot.lane.b32.xlu0 %v687, 6
        %v720 = vpop.permute.xlu0 %719
        %721 = vrot.lane.b32.xlu0 %v690, 6
        %v722 = vpop.permute.xlu0 %721
        %v725 = vunpack.c.l.b16 %v283
        %v726 = vunpack.c.l.b16 %v284
        %v727 = vpack.c.b16 %v726, %v725
        %728 = vrot.lane.b32.xlu0 %v354, 9
        %v729 = vpop.permute.xlu0 %728
        %730 = vrot.lane.b32.xlu0 %v355, 9
        %v731 = vpop.permute.xlu0 %730
        %732 = vrot.lane.b32.xlu0 %v356, 9
        %v733 = vpop.permute.xlu0 %732
        %734 = vrot.lane.b32.xlu0 %v357, 9
        %v735 = vpop.permute.xlu0 %734
        %736 = vrot.lane.b32.xlu0 %v358, 9
        %v737 = vpop.permute.xlu0 %736
        %738 = vrot.lane.b32.xlu0 %v359, 9
        %v739 = vpop.permute.xlu0 %738
        %740 = vrot.lane.b32.xlu0 %v360, 9
        %v741 = vpop.permute.xlu0 %740
        %742 = vrot.lane.b32.xlu0 %v361, 9
        %v743 = vpop.permute.xlu0 %742
        %744 = vrot.lane.b32.xlu0 %v362, 9
        %v745 = vpop.permute.xlu0 %744
        %746 = vrot.lane.b32.xlu0 %v363, 9
        %v747 = vpop.permute.xlu0 %746
        %748 = vrot.lane.b32.xlu0 %v364, 9
        %v749 = vpop.permute.xlu0 %748
        %750 = vrot.lane.b32.xlu0 %v365, 9
        %v751 = vpop.permute.xlu0 %750
        %752 = vrot.lane.b32.xlu0 %v366, 9
        %v753 = vpop.permute.xlu0 %752
        %754 = vrot.lane.b32.xlu0 %v367, 9
        %v755 = vpop.permute.xlu0 %754
        %756 = vrot.lane.b32.xlu0 %v368, 9
        %v757 = vpop.permute.xlu0 %756
        %758 = vrot.lane.b32.xlu0 %v727, 9
        %v759 = vpop.permute.xlu0 %758
        %v761 = vunpack.c.l.b16 %v285
        %v762 = vpack.c.b16 %v761, %v761
        %v764 = vshrl.u32 %v727, 16
        %v766 = vshll.u32 %v727, 16
        %v768 = vrot.slane %v766, 1
        %v769 = vor.u32 %v764, %v768
        %v771 = vshll.u32 %v762, 16
        %v773 = vrot.slane %v771, 1
        %v774 = vsel %vm417, %v769, %v773
        %775 = vrot.lane.b32.xlu0 %v441, 12
        %v776 = vpop.permute.xlu0 %775
        %777 = vrot.lane.b32.xlu0 %v453, 12
        %v778 = vpop.permute.xlu0 %777
        %779 = vrot.lane.b32.xlu0 %v465, 12
        %v780 = vpop.permute.xlu0 %779
        %781 = vrot.lane.b32.xlu0 %v477, 12
        %v782 = vpop.permute.xlu0 %781
        %783 = vrot.lane.b32.xlu0 %v489, 12
        %v784 = vpop.permute.xlu0 %783
        %785 = vrot.lane.b32.xlu0 %v501, 12
        %v786 = vpop.permute.xlu0 %785
        %787 = vrot.lane.b32.xlu0 %v513, 12
        %v788 = vpop.permute.xlu0 %787
        %789 = vrot.lane.b32.xlu0 %v525, 12
        %v790 = vpop.permute.xlu0 %789
        %791 = vrot.lane.b32.xlu0 %v537, 12
        %v792 = vpop.permute.xlu0 %791
        %793 = vrot.lane.b32.xlu0 %v549, 12
        %v794 = vpop.permute.xlu0 %793
        %795 = vrot.lane.b32.xlu0 %v561, 12
        %v796 = vpop.permute.xlu0 %795
        %797 = vrot.lane.b32.xlu0 %v573, 12
        %v798 = vpop.permute.xlu0 %797
        %799 = vrot.lane.b32.xlu0 %v585, 12
        %v800 = vpop.permute.xlu0 %799
        %801 = vrot.lane.b32.xlu0 %v597, 12
        %v802 = vpop.permute.xlu0 %801
        %803 = vrot.lane.b32.xlu0 %v609, 12
        %v804 = vpop.permute.xlu0 %803
        %805 = vrot.lane.b32.xlu0 %v774, 12
        %v806 = vpop.permute.xlu0 %805
        %v807 = vrot.slane %v727, 1
        %v808 = vrot.slane %v762, 1
        %v809 = vsel %vm642, %v807, %v808
        %810 = vrot.lane.b32.xlu0 %v648, 15
        %v811 = vpop.permute.xlu0 %810
        %812 = vrot.lane.b32.xlu0 %v651, 15
        %v813 = vpop.permute.xlu0 %812
        %814 = vrot.lane.b32.xlu0 %v654, 15
        %v815 = vpop.permute.xlu0 %814
        %816 = vrot.lane.b32.xlu0 %v657, 15
        %v817 = vpop.permute.xlu0 %816
        %818 = vrot.lane.b32.xlu0 %v660, 15
        %v819 = vpop.permute.xlu0 %818
        %820 = vrot.lane.b32.xlu0 %v663, 15
        %v821 = vpop.permute.xlu0 %820
        %822 = vrot.lane.b32.xlu0 %v666, 15
        %v823 = vpop.permute.xlu0 %822
        %824 = vrot.lane.b32.xlu0 %v669, 15
        %v825 = vpop.permute.xlu0 %824
        %826 = vrot.lane.b32.xlu0 %v672, 15
        %v827 = vpop.permute.xlu0 %826
        %828 = vrot.lane.b32.xlu0 %v675, 15
        %v829 = vpop.permute.xlu0 %828
        %830 = vrot.lane.b32.xlu0 %v678, 15
        %v831 = vpop.permute.xlu0 %830
        %832 = vrot.lane.b32.xlu0 %v681, 15
        %v833 = vpop.permute.xlu0 %832
        %834 = vrot.lane.b32.xlu0 %v684, 15
        %v835 = vpop.permute.xlu0 %834
        %836 = vrot.lane.b32.xlu0 %v687, 15
        %v837 = vpop.permute.xlu0 %836
        %838 = vrot.lane.b32.xlu0 %v690, 15
        %v839 = vpop.permute.xlu0 %838
        %840 = vrot.lane.b32.xlu0 %v809, 15
        %v841 = vpop.permute.xlu0 %840
        %v844 = vunpack.c.l.b16 %v286
        %v845 = vunpack.c.l.b16 %v287
        %v846 = vpack.c.b16 %v845, %v844
        %847 = vrot.lane.b32.xlu0 %v355, 18
        %v848 = vpop.permute.xlu0 %847
        %849 = vrot.lane.b32.xlu0 %v356, 18
        %v850 = vpop.permute.xlu0 %849
        %851 = vrot.lane.b32.xlu0 %v357, 18
        %v852 = vpop.permute.xlu0 %851
        %853 = vrot.lane.b32.xlu0 %v358, 18
        %v854 = vpop.permute.xlu0 %853
        %855 = vrot.lane.b32.xlu0 %v359, 18
        %v856 = vpop.permute.xlu0 %855
        %857 = vrot.lane.b32.xlu0 %v360, 18
        %v858 = vpop.permute.xlu0 %857
        %859 = vrot.lane.b32.xlu0 %v361, 18
        %v860 = vpop.permute.xlu0 %859
        %861 = vrot.lane.b32.xlu0 %v362, 18
        %v862 = vpop.permute.xlu0 %861
        %863 = vrot.lane.b32.xlu0 %v363, 18
        %v864 = vpop.permute.xlu0 %863
        %865 = vrot.lane.b32.xlu0 %v364, 18
        %v866 = vpop.permute.xlu0 %865
        %867 = vrot.lane.b32.xlu0 %v365, 18
        %v868 = vpop.permute.xlu0 %867
        %869 = vrot.lane.b32.xlu0 %v366, 18
        %v870 = vpop.permute.xlu0 %869
        %871 = vrot.lane.b32.xlu0 %v367, 18
        %v872 = vpop.permute.xlu0 %871
        %873 = vrot.lane.b32.xlu0 %v368, 18
        %v874 = vpop.permute.xlu0 %873
        %875 = vrot.lane.b32.xlu0 %v727, 18
        %v876 = vpop.permute.xlu0 %875
        %877 = vrot.lane.b32.xlu0 %v846, 18
        %v878 = vpop.permute.xlu0 %877
        %v880 = vunpack.c.l.b16 %v288
        %v881 = vpack.c.b16 %v880, %v880
        %v883 = vshrl.u32 %v846, 16
        %v885 = vshll.u32 %v846, 16
        %v887 = vrot.slane %v885, 1
        %v888 = vor.u32 %v883, %v887
        %v890 = vshll.u32 %v881, 16
        %v892 = vrot.slane %v890, 1
        %v893 = vsel %vm417, %v888, %v892
        %894 = vrot.lane.b32.xlu0 %v453, 21
        %v895 = vpop.permute.xlu0 %894
        %896 = vrot.lane.b32.xlu0 %v465, 21
        %v897 = vpop.permute.xlu0 %896
        %898 = vrot.lane.b32.xlu0 %v477, 21
        %v899 = vpop.permute.xlu0 %898
        %900 = vrot.lane.b32.xlu0 %v489, 21
        %v901 = vpop.permute.xlu0 %900
        %902 = vrot.lane.b32.xlu0 %v501, 21
        %v903 = vpop.permute.xlu0 %902
        %904 = vrot.lane.b32.xlu0 %v513, 21
        %v905 = vpop.permute.xlu0 %904
        %906 = vrot.lane.b32.xlu0 %v525, 21
        %v907 = vpop.permute.xlu0 %906
        %908 = vrot.lane.b32.xlu0 %v537, 21
        %v909 = vpop.permute.xlu0 %908
        %910 = vrot.lane.b32.xlu0 %v549, 21
        %v911 = vpop.permute.xlu0 %910
        %912 = vrot.lane.b32.xlu0 %v561, 21
        %v913 = vpop.permute.xlu0 %912
        %914 = vrot.lane.b32.xlu0 %v573, 21
        %v915 = vpop.permute.xlu0 %914
        %916 = vrot.lane.b32.xlu0 %v585, 21
        %v917 = vpop.permute.xlu0 %916
        %918 = vrot.lane.b32.xlu0 %v597, 21
        %v919 = vpop.permute.xlu0 %918
        %920 = vrot.lane.b32.xlu0 %v609, 21
        %v921 = vpop.permute.xlu0 %920
        %922 = vrot.lane.b32.xlu0 %v774, 21
        %v923 = vpop.permute.xlu0 %922
        %924 = vrot.lane.b32.xlu0 %v893, 21
        %v925 = vpop.permute.xlu0 %924
        %v926 = vrot.slane %v846, 1
        %v927 = vrot.slane %v881, 1
        %v928 = vsel %vm642, %v926, %v927
        %929 = vrot.lane.b32.xlu0 %v651, 24
        %v930 = vpop.permute.xlu0 %929
        %931 = vrot.lane.b32.xlu0 %v654, 24
        %v932 = vpop.permute.xlu0 %931
        %933 = vrot.lane.b32.xlu0 %v657, 24
        %v934 = vpop.permute.xlu0 %933
        %935 = vrot.lane.b32.xlu0 %v660, 24
        %v936 = vpop.permute.xlu0 %935
        %937 = vrot.lane.b32.xlu0 %v663, 24
        %v938 = vpop.permute.xlu0 %937
        %939 = vrot.lane.b32.xlu0 %v666, 24
        %v940 = vpop.permute.xlu0 %939
        %941 = vrot.lane.b32.xlu0 %v669, 24
        %v942 = vpop.permute.xlu0 %941
        %943 = vrot.lane.b32.xlu0 %v672, 24
        %v944 = vpop.permute.xlu0 %943
        %945 = vrot.lane.b32.xlu0 %v675, 24
        %v946 = vpop.permute.xlu0 %945
        %947 = vrot.lane.b32.xlu0 %v678, 24
        %v948 = vpop.permute.xlu0 %947
        %949 = vrot.lane.b32.xlu0 %v681, 24
        %v950 = vpop.permute.xlu0 %949
        %951 = vrot.lane.b32.xlu0 %v684, 24
        %v952 = vpop.permute.xlu0 %951
        %953 = vrot.lane.b32.xlu0 %v687, 24
        %v954 = vpop.permute.xlu0 %953
        %955 = vrot.lane.b32.xlu0 %v690, 24
        %v956 = vpop.permute.xlu0 %955
        %957 = vrot.lane.b32.xlu0 %v809, 24
        %v958 = vpop.permute.xlu0 %957
        %959 = vrot.lane.b32.xlu0 %v928, 24
        %v960 = vpop.permute.xlu0 %959
        %vm961 = vcmask 23552
        %v963 = vsel %vm961, %v353, %v611
        %v965 = vsel %vm961, %v354, %v613
        %v967 = vsel %vm961, %v355, %v615
        %v969 = vsel %vm961, %v356, %v617
        %v971 = vsel %vm961, %v357, %v619
        %v973 = vsel %vm961, %v358, %v621
        %v975 = vsel %vm961, %v359, %v623
        %v977 = vsel %vm961, %v360, %v625
        %v979 = vsel %vm961, %v361, %v627
        %v981 = vsel %vm961, %v362, %v629
        %v983 = vsel %vm961, %v363, %v631
        %v985 = vsel %vm961, %v364, %v633
        %v987 = vsel %vm961, %v365, %v635
        %v989 = vsel %vm961, %v366, %v637
        %v991 = vsel %vm961, %v367, %v639
        %v993 = vsel %vm961, %v368, %v641
        %vm994 = vcmask 48128
        %v996 = vsel %vm994, %v963, %v692
        %v998 = vsel %vm994, %v965, %v694
        %v1000 = vsel %vm994, %v967, %v696
        %v1002 = vsel %vm994, %v969, %v698
        %v1004 = vsel %vm994, %v971, %v700
        %v1006 = vsel %vm994, %v973, %v702
        %v1008 = vsel %vm994, %v975, %v704
        %v1010 = vsel %vm994, %v977, %v706
        %v1012 = vsel %vm994, %v979, %v708
        %v1014 = vsel %vm994, %v981, %v710
        %v1016 = vsel %vm994, %v983, %v712
        %v1018 = vsel %vm994, %v985, %v714
        %v1020 = vsel %vm994, %v987, %v716
        %v1022 = vsel %vm994, %v989, %v718
        %v1024 = vsel %vm994, %v991, %v720
        %v1026 = vsel %vm994, %v993, %v722
        %vm1027 = vcmask 72704
        %v1029 = vsel %vm1027, %v996, %v729
        %v1031 = vsel %vm1027, %v998, %v731
        %v1033 = vsel %vm1027, %v1000, %v733
        %v1035 = vsel %vm1027, %v1002, %v735
        %v1037 = vsel %vm1027, %v1004, %v737
        %v1039 = vsel %vm1027, %v1006, %v739
        %v1041 = vsel %vm1027, %v1008, %v741
        %v1043 = vsel %vm1027, %v1010, %v743
        %v1045 = vsel %vm1027, %v1012, %v745
        %v1047 = vsel %vm1027, %v1014, %v747
        %v1049 = vsel %vm1027, %v1016, %v749
        %v1051 = vsel %vm1027, %v1018, %v751
        %v1053 = vsel %vm1027, %v1020, %v753
        %v1055 = vsel %vm1027, %v1022, %v755
        %v1057 = vsel %vm1027, %v1024, %v757
        %v1059 = vsel %vm1027, %v1026, %v759
        %vm1060 = vcmask 97280
        %v1062 = vsel %vm1060, %v1029, %v776
        %v1064 = vsel %vm1060, %v1031, %v778
        %v1066 = vsel %vm1060, %v1033, %v780
        %v1068 = vsel %vm1060, %v1035, %v782
        %v1070 = vsel %vm1060, %v1037, %v784
        %v1072 = vsel %vm1060, %v1039, %v786
        %v1074 = vsel %vm1060, %v1041, %v788
        %v1076 = vsel %vm1060, %v1043, %v790
        %v1078 = vsel %vm1060, %v1045, %v792
        %v1080 = vsel %vm1060, %v1047, %v794
        %v1082 = vsel %vm1060, %v1049, %v796
        %v1084 = vsel %vm1060, %v1051, %v798
        %v1086 = vsel %vm1060, %v1053, %v800
        %v1088 = vsel %vm1060, %v1055, %v802
        %v1090 = vsel %vm1060, %v1057, %v804
        %v1092 = vsel %vm1060, %v1059, %v806
        %vm1093 = vcmask 121856
        %v1095 = vsel %vm1093, %v1062, %v811
        %v1097 = vsel %vm1093, %v1064, %v813
        %v1099 = vsel %vm1093, %v1066, %v815
        %v1101 = vsel %vm1093, %v1068, %v817
        %v1103 = vsel %vm1093, %v1070, %v819
        %v1105 = vsel %vm1093, %v1072, %v821
        %v1107 = vsel %vm1093, %v1074, %v823
        %v1109 = vsel %vm1093, %v1076, %v825
        %v1111 = vsel %vm1093, %v1078, %v827
        %v1113 = vsel %vm1093, %v1080, %v829
        %v1115 = vsel %vm1093, %v1082, %v831
        %v1117 = vsel %vm1093, %v1084, %v833
        %v1119 = vsel %vm1093, %v1086, %v835
        %v1121 = vsel %vm1093, %v1088, %v837
        %v1123 = vsel %vm1093, %v1090, %v839
        %v1125 = vsel %vm1093, %v1092, %v841
        %vm1126 = vcmask 146432
        %v1128 = vsel %vm1126, %v1095, %v848
        %v1130 = vsel %vm1126, %v1097, %v850
        %v1132 = vsel %vm1126, %v1099, %v852
        %v1134 = vsel %vm1126, %v1101, %v854
        %v1136 = vsel %vm1126, %v1103, %v856
        %v1138 = vsel %vm1126, %v1105, %v858
        %v1140 = vsel %vm1126, %v1107, %v860
        %v1142 = vsel %vm1126, %v1109, %v862
        %v1144 = vsel %vm1126, %v1111, %v864
        %v1146 = vsel %vm1126, %v1113, %v866
        %v1148 = vsel %vm1126, %v1115, %v868
        %v1150 = vsel %vm1126, %v1117, %v870
        %v1152 = vsel %vm1126, %v1119, %v872
        %v1154 = vsel %vm1126, %v1121, %v874
        %v1156 = vsel %vm1126, %v1123, %v876
        %v1158 = vsel %vm1126, %v1125, %v878
        %vm1159 = vcmask 171008
        %v1161 = vsel %vm1159, %v1128, %v895
        %v1163 = vsel %vm1159, %v1130, %v897
        %v1165 = vsel %vm1159, %v1132, %v899
        %v1167 = vsel %vm1159, %v1134, %v901
        %v1169 = vsel %vm1159, %v1136, %v903
        %v1171 = vsel %vm1159, %v1138, %v905
        %v1173 = vsel %vm1159, %v1140, %v907
        %v1175 = vsel %vm1159, %v1142, %v909
        %v1177 = vsel %vm1159, %v1144, %v911
        %v1179 = vsel %vm1159, %v1146, %v913
        %v1181 = vsel %vm1159, %v1148, %v915
        %v1183 = vsel %vm1159, %v1150, %v917
        %v1185 = vsel %vm1159, %v1152, %v919
        %v1187 = vsel %vm1159, %v1154, %v921
        %v1189 = vsel %vm1159, %v1156, %v923
        %v1191 = vsel %vm1159, %v1158, %v925
        %vm1192 = vcmask 195584
        %v1194 = vsel %vm1192, %v1161, %v930
        %v1196 = vsel %vm1192, %v1163, %v932
        %v1198 = vsel %vm1192, %v1165, %v934
        %v1200 = vsel %vm1192, %v1167, %v936
        %v1202 = vsel %vm1192, %v1169, %v938
        %v1204 = vsel %vm1192, %v1171, %v940
        %v1206 = vsel %vm1192, %v1173, %v942
        %v1208 = vsel %vm1192, %v1175, %v944
        %v1210 = vsel %vm1192, %v1177, %v946
        %v1212 = vsel %vm1192, %v1179, %v948
        %v1214 = vsel %vm1192, %v1181, %v950
        %v1216 = vsel %vm1192, %v1183, %v952
        %v1218 = vsel %vm1192, %v1185, %v954
        %v1220 = vsel %vm1192, %v1187, %v956
        %v1222 = vsel %vm1192, %v1189, %v958
        %v1224 = vsel %vm1192, %v1191, %v960
        %v1225 = vld [vmem:[%s1] sm:$0xf]
        %v1226 = vld [vmem:[%s1 + $0x4] sm:$0xf]
        %v1227 = vld [vmem:[%s1 + $0x8] sm:$0xf]
        %v1228 = vld [vmem:[%s1 + $0xc] sm:$0x3]
        %v1229 = vld [vmem:[%s2] sm:$0x1]
        %v1231 = vlaneseq
        %v1232 = vshrl.u32 %v1231, 7
        %v1233 = vsub.s32 0, %v1232
        %v1234 = vrot.slane %v1229, %v1233
        %v1240 = vunpack.c.l.b16 %v1225
        %v1241 = vunpack.c.l.b16 %v1226
        %v1242 = vunpack.c.l.b16 %v1227
        %v1243 = vunpack.c.l.b16 %v1228
        %v1244 = vpack.c.b16 %v1241, %v1240
        %v1245 = vpack.c.b16 %v1243, %v1242
        %vm1247 = vcmask 220160
        %v1248 = vsel %vm1247, %v1194, 0
        %v1250 = vsel %vm1247, %v1196, 0
        %v1252 = vsel %vm1247, %v1198, 0
        %v1254 = vsel %vm1247, %v1200, 0
        %v1256 = vsel %vm1247, %v1202, 0
        %v1258 = vsel %vm1247, %v1204, 0
        %v1260 = vsel %vm1247, %v1206, 0
        %v1262 = vsel %vm1247, %v1208, 0
        %v1264 = vsel %vm1247, %v1210, 0
        %v1266 = vsel %vm1247, %v1212, 0
        %v1268 = vsel %vm1247, %v1214, 0
        %v1270 = vsel %vm1247, %v1216, 0
        %v1272 = vsel %vm1247, %v1218, 0
        %v1274 = vsel %vm1247, %v1220, 0
        %v1276 = vsel %vm1247, %v1222, 0
        %v1278 = vsel %vm1247, %v1224, 0
        %vm1280 = vcmask 1044480
        %vm1281 = vcmask 1045504
        %v1282 = vsel %vm1280, 4294967295, 65535
        %v1283 = vsel %vm1281, %v1282, 0
        %v1285 = vand.u32 %v1245, %v1283
        %1287 = vmatprep.subr.bf16.mxu0 0
        %1288 = vmatpush1.bf16.msra.mxu0 0
        %1289 = vmatprep.subr.bf16.mxu0 0
        %1290 = vmatpush1.bf16.msra.mxu0 0
        %1291 = vmatprep.subr.bf16.mxu0 0
        %1292 = vmatpush1.bf16.msra.mxu0 0
        %1293 = vmatprep.subr.bf16.mxu0 0
        %1294 = vmatpush1.bf16.msra.mxu0 0
        %1295 = vmatprep.subr.bf16.mxu0 0
        %1296 = vmatpush1.bf16.msra.mxu0 0
        %1297 = vmatprep.subr.bf16.mxu0 0
        %1298 = vmatpush1.bf16.msra.mxu0 0
        %1299 = vmatprep.subr.bf16.mxu0 0
        %1300 = vmatpush1.bf16.msra.mxu0 %v1285
        %1301 = vmatprep.subr.bf16.mxu0 0
        %1302 = vmatpush1.bf16.msra.mxu0 %v1244
        %1303 = vmatprep.subr.bf16.mxu0 0
        %1304 = vmatpush2.bf16.msra.mxu0 0
        %1305 = vmatprep.subr.bf16.mxu0 0
        %1306 = vmatpush2.bf16.msra.mxu0 0
        %1307 = vmatprep.subr.bf16.mxu0 0
        %1308 = vmatpush2.bf16.msra.mxu0 0
        %1309 = vmatprep.subr.bf16.mxu0 0
        %1310 = vmatpush2.bf16.msra.mxu0 0
        %1311 = vmatprep.subr.bf16.mxu0 0
        %1312 = vmatpush2.bf16.msra.mxu0 0
        %1313 = vmatprep.subr.bf16.mxu0 0
        %1314 = vmatpush2.bf16.msra.mxu0 0
        %1315 = vmatprep.subr.bf16.mxu0 0
        %1316 = vmatpush2.bf16.msra.mxu0 0
        %1317 = vmatprep.subr.bf16.mxu0 0
        %1318 = vmatpush2.bf16.msra.mxu0 0
        %1319 = vmatprep.mubr.bf16.mxu0 0
        %1320 = vmatmul.mubr.bf16.gmra.mxu0 %v1248
        %v1321 = vpop.f32.mrf.mxu0
        %v1322 = vadd.f32 %v1234, %v1321
        %v1323 = vpop.f32.mrf.mxu0
        %v1324 = vpop.f32.mrf.mxu0
        %v1325 = vadd.f32 %v1234, %v1324
        %v1326 = vpop.f32.mrf.mxu0
        %1327 = vmatprep.mubr.bf16.mxu0 0
        %1328 = vmatmul.mubr.bf16.gmra.mxu0 %v1250
        %v1329 = vpop.f32.mrf.mxu0
        %v1330 = vadd.f32 %v1234, %v1329
        %v1331 = vpop.f32.mrf.mxu0
        %v1332 = vpop.f32.mrf.mxu0
        %v1333 = vadd.f32 %v1234, %v1332
        %v1334 = vpop.f32.mrf.mxu0
        %1335 = vmatprep.mubr.bf16.mxu0 0
        %1336 = vmatmul.mubr.bf16.gmra.mxu0 %v1252
        %v1337 = vpop.f32.mrf.mxu0
        %v1338 = vadd.f32 %v1234, %v1337
        %v1339 = vpop.f32.mrf.mxu0
        %v1340 = vpop.f32.mrf.mxu0
        %v1341 = vadd.f32 %v1234, %v1340
        %v1342 = vpop.f32.mrf.mxu0
        %1343 = vmatprep.mubr.bf16.mxu0 0
        %1344 = vmatmul.mubr.bf16.gmra.mxu0 %v1254
        %v1345 = vpop.f32.mrf.mxu0
        %v1346 = vadd.f32 %v1234, %v1345
        %v1347 = vpop.f32.mrf.mxu0
        %v1348 = vpop.f32.mrf.mxu0
        %v1349 = vadd.f32 %v1234, %v1348
        %v1350 = vpop.f32.mrf.mxu0
        %1351 = vmatprep.mubr.bf16.mxu0 0
        %1352 = vmatmul.mubr.bf16.gmra.mxu0 %v1256
        %v1353 = vpop.f32.mrf.mxu0
        %v1354 = vadd.f32 %v1234, %v1353
        %v1355 = vpop.f32.mrf.mxu0
        %v1356 = vpop.f32.mrf.mxu0
        %v1357 = vadd.f32 %v1234, %v1356
        %v1358 = vpop.f32.mrf.mxu0
        %1359 = vmatprep.mubr.bf16.mxu0 0
        %1360 = vmatmul.mubr.bf16.gmra.mxu0 %v1258
        %v1361 = vpop.f32.mrf.mxu0
        %v1362 = vadd.f32 %v1234, %v1361
        %v1363 = vpop.f32.mrf.mxu0
        %v1364 = vpop.f32.mrf.mxu0
        %v1365 = vadd.f32 %v1234, %v1364
        %v1366 = vpop.f32.mrf.mxu0
        %1367 = vmatprep.mubr.bf16.mxu0 0
        %1368 = vmatmul.mubr.bf16.gmra.mxu0 %v1260
        %v1369 = vpop.f32.mrf.mxu0
        %v1370 = vadd.f32 %v1234, %v1369
        %v1371 = vpop.f32.mrf.mxu0
        %v1372 = vpop.f32.mrf.mxu0
        %v1373 = vadd.f32 %v1234, %v1372
        %v1374 = vpop.f32.mrf.mxu0
        %1375 = vmatprep.mubr.bf16.mxu0 0
        %1376 = vmatmul.mubr.bf16.gmra.mxu0 %v1262
        %v1377 = vpop.f32.mrf.mxu0
        %v1378 = vadd.f32 %v1234, %v1377
        %v1379 = vpop.f32.mrf.mxu0
        %v1380 = vpop.f32.mrf.mxu0
        %v1381 = vadd.f32 %v1234, %v1380
        %v1382 = vpop.f32.mrf.mxu0
        %1383 = vmatprep.mubr.bf16.mxu0 0
        %1384 = vmatmul.mubr.bf16.gmra.mxu0 %v1264
        %v1385 = vpop.f32.mrf.mxu0
        %v1386 = vadd.f32 %v1234, %v1385
        %v1387 = vpop.f32.mrf.mxu0
        %v1388 = vpop.f32.mrf.mxu0
        %v1389 = vadd.f32 %v1234, %v1388
        %v1390 = vpop.f32.mrf.mxu0
        %1391 = vmatprep.mubr.bf16.mxu0 0
        %1392 = vmatmul.mubr.bf16.gmra.mxu0 %v1266
        %v1393 = vpop.f32.mrf.mxu0
        %v1394 = vadd.f32 %v1234, %v1393
        %v1395 = vpop.f32.mrf.mxu0
        %v1396 = vpop.f32.mrf.mxu0
        %v1397 = vadd.f32 %v1234, %v1396
        %v1398 = vpop.f32.mrf.mxu0
        %1399 = vmatprep.mubr.bf16.mxu0 0
        %1400 = vmatmul.mubr.bf16.gmra.mxu0 %v1268
        %v1401 = vpop.f32.mrf.mxu0
        %v1402 = vadd.f32 %v1234, %v1401
        %v1403 = vpop.f32.mrf.mxu0
        %v1404 = vpop.f32.mrf.mxu0
        %v1405 = vadd.f32 %v1234, %v1404
        %v1406 = vpop.f32.mrf.mxu0
        %1407 = vmatprep.mubr.bf16.mxu0 0
        %1408 = vmatmul.mubr.bf16.gmra.mxu0 %v1270
        %v1409 = vpop.f32.mrf.mxu0
        %v1410 = vadd.f32 %v1234, %v1409
        %v1411 = vpop.f32.mrf.mxu0
        %v1412 = vpop.f32.mrf.mxu0
        %v1413 = vadd.f32 %v1234, %v1412
        %v1414 = vpop.f32.mrf.mxu0
        %1415 = vmatprep.mubr.bf16.mxu0 0
        %1416 = vmatmul.mubr.bf16.gmra.mxu0 %v1272
        %v1417 = vpop.f32.mrf.mxu0
        %v1418 = vadd.f32 %v1234, %v1417
        %v1419 = vpop.f32.mrf.mxu0
        %v1420 = vpop.f32.mrf.mxu0
        %v1421 = vadd.f32 %v1234, %v1420
        %v1422 = vpop.f32.mrf.mxu0
        %1423 = vmatprep.mubr.bf16.mxu0 0
        %1424 = vmatmul.mubr.bf16.gmra.mxu0 %v1274
        %v1425 = vpop.f32.mrf.mxu0
        %v1426 = vadd.f32 %v1234, %v1425
        %v1427 = vpop.f32.mrf.mxu0
        %v1428 = vpop.f32.mrf.mxu0
        %v1429 = vadd.f32 %v1234, %v1428
        %v1430 = vpop.f32.mrf.mxu0
        %1431 = vmatprep.mubr.bf16.mxu0 0
        %1432 = vmatmul.mubr.bf16.gmra.mxu0 %v1276
        %v1433 = vpop.f32.mrf.mxu0
        %v1434 = vadd.f32 %v1234, %v1433
        %v1435 = vpop.f32.mrf.mxu0
        %v1436 = vpop.f32.mrf.mxu0
        %v1437 = vadd.f32 %v1234, %v1436
        %v1438 = vpop.f32.mrf.mxu0
        %1439 = vmatprep.mubr.bf16.mxu0 0
        %1440 = vmatmul.mubr.bf16.gmra.mxu0 %v1278
        %v1441 = vpop.f32.mrf.mxu0
        %v1442 = vadd.f32 %v1234, %v1441
        %v1443 = vpop.f32.mrf.mxu0
        %v1444 = vpop.f32.mrf.mxu0
        %v1445 = vadd.f32 %v1234, %v1444
        %v1446 = vpop.f32.mrf.mxu0
        %1447 = vdwg.mxu0
        %v1448 = vmax.f32 %v1322, 0.0
        %v1449 = vmax.f32 %v1325, 0.0
        %v1450 = vmax.f32 %v1330, 0.0
        %v1451 = vmax.f32 %v1333, 0.0
        %v1452 = vmax.f32 %v1338, 0.0
        %v1453 = vmax.f32 %v1341, 0.0
        %v1454 = vmax.f32 %v1346, 0.0
        %v1455 = vmax.f32 %v1349, 0.0
        %v1456 = vmax.f32 %v1354, 0.0
        %v1457 = vmax.f32 %v1357, 0.0
        %v1458 = vmax.f32 %v1362, 0.0
        %v1459 = vmax.f32 %v1365, 0.0
        %v1460 = vmax.f32 %v1370, 0.0
        %v1461 = vmax.f32 %v1373, 0.0
        %v1462 = vmax.f32 %v1378, 0.0
        %v1463 = vmax.f32 %v1381, 0.0
        %v1464 = vmax.f32 %v1386, 0.0
        %v1465 = vmax.f32 %v1389, 0.0
        %v1466 = vmax.f32 %v1394, 0.0
        %v1467 = vmax.f32 %v1397, 0.0
        %v1468 = vmax.f32 %v1402, 0.0
        %v1469 = vmax.f32 %v1405, 0.0
        %v1470 = vmax.f32 %v1410, 0.0
        %v1471 = vmax.f32 %v1413, 0.0
        %v1472 = vmax.f32 %v1418, 0.0
        %v1473 = vmax.f32 %v1421, 0.0
        %v1474 = vmax.f32 %v1426, 0.0
        %v1475 = vmax.f32 %v1429, 0.0
        %v1476 = vmax.f32 %v1434, 0.0
        %v1477 = vmax.f32 %v1437, 0.0
        %v1478 = vmax.f32 %v1442, 0.0
        %v1479 = vmax.f32 %v1445, 0.0
        %vm1480 = vcmask 523264
        %1481 = vst.msk [vmem:[%s226] sm:$0xff] %vm1480, %v1448
        %1482 = vst.msk [vmem:[%s226 + $0x8] sm:$0xff] %vm1480, %v1449
        %1483 = vst.msk [vmem:[%s226 + $0x10] sm:$0xff] %vm1480, %v1450
        %1484 = vst.msk [vmem:[%s226 + $0x18] sm:$0xff] %vm1480, %v1451
        %1485 = vst.msk [vmem:[%s226 + $0x20] sm:$0xff] %vm1480, %v1452
        %1486 = vst.msk [vmem:[%s226 + $0x28] sm:$0xff] %vm1480, %v1453
        %1487 = vst.msk [vmem:[%s226 + $0x30] sm:$0xff] %vm1480, %v1454
        %1488 = vst.msk [vmem:[%s226 + $0x38] sm:$0xff] %vm1480, %v1455
        %1489 = vst.msk [vmem:[%s226 + $0x40] sm:$0xff] %vm1480, %v1456
        %1490 = vst.msk [vmem:[%s226 + $0x48] sm:$0xff] %vm1480, %v1457
        %1491 = vst.msk [vmem:[%s226 + $0x50] sm:$0xff] %vm1480, %v1458
        %1492 = vst.msk [vmem:[%s226 + $0x58] sm:$0xff] %vm1480, %v1459
        %1493 = vst.msk [vmem:[%s226 + $0x60] sm:$0xff] %vm1480, %v1460
        %1494 = vst.msk [vmem:[%s226 + $0x68] sm:$0xff] %vm1480, %v1461
        %1495 = vst.msk [vmem:[%s226 + $0x70] sm:$0xff] %vm1480, %v1462
        %1496 = vst.msk [vmem:[%s226 + $0x78] sm:$0xff] %vm1480, %v1463
        %1497 = vst.msk [vmem:[%s226 + $0x80] sm:$0xff] %vm1480, %v1464
        %1498 = vst.msk [vmem:[%s226 + $0x88] sm:$0xff] %vm1480, %v1465
        %1499 = vst.msk [vmem:[%s226 + $0x90] sm:$0xff] %vm1480, %v1466
        %1500 = vst.msk [vmem:[%s226 + $0x98] sm:$0xff] %vm1480, %v1467
        %1501 = vst.msk [vmem:[%s226 + $0xa0] sm:$0xff] %vm1480, %v1468
        %1502 = vst.msk [vmem:[%s226 + $0xa8] sm:$0xff] %vm1480, %v1469
        %1503 = vst.msk [vmem:[%s226 + $0xb0] sm:$0xff] %vm1480, %v1470
        %1504 = vst.msk [vmem:[%s226 + $0xb8] sm:$0xff] %vm1480, %v1471
        %1505 = vst.msk [vmem:[%s226 + $0xc0] sm:$0xff] %vm1480, %v1472
        %1506 = vst.msk [vmem:[%s226 + $0xc8] sm:$0xff] %vm1480, %v1473
        %1507 = vst.msk [vmem:[%s226 + $0xd0] sm:$0xff] %vm1480, %v1474
        %1508 = vst.msk [vmem:[%s226 + $0xd8] sm:$0xff] %vm1480, %v1475
        %1509 = vst.msk [vmem:[%s226 + $0xe0] sm:$0xff] %vm1480, %v1476
        %1510 = vst.msk [vmem:[%s226 + $0xe8] sm:$0xff] %vm1480, %v1477
        %1511 = vst.msk [vmem:[%s226 + $0xf0] sm:$0xff] %vm1480, %v1478
        %1512 = vst.msk [vmem:[%s226 + $0xf8] sm:$0xff] %vm1480, %v1479
        %1513 = vxpose.xlu0.b32.start [1/16] %v1448, 128
        %1514 = vxpose.xlu0.b32.cont [2/16] %v1449, 128
        %1515 = vxpose.xlu0.b32.cont [3/16] %v1450, 128
        %1516 = vxpose.xlu0.b32.cont [4/16] %v1451, 128
        %1517 = vxpose.xlu0.b32.cont [5/16] %v1452, 128
        %1518 = vxpose.xlu0.b32.cont [6/16] %v1453, 128
        %1519 = vxpose.xlu0.b32.cont [7/16] %v1454, 128
        %1520 = vxpose.xlu0.b32.cont [8/16] %v1455, 128
        %1521 = vxpose.xlu0.b32.cont [9/16] %v1456, 128
        %1522 = vxpose.xlu0.b32.cont [10/16] %v1457, 128
        %1523 = vxpose.xlu0.b32.cont [11/16] %v1458, 128
        %1524 = vxpose.xlu0.b32.cont [12/16] %v1459, 128
        %1525 = vxpose.xlu0.b32.cont [13/16] %v1460, 128
        %1526 = vxpose.xlu0.b32.cont [14/16] %v1461, 128
        %1527 = vxpose.xlu0.b32.cont [15/16] %v1462, 128
        %1528 = vxpose.xlu0.b32.end [16/16] %v1463, 128
        %v1529 = vpop.trf.xlu0
        %v1530 = vpop.trf.xlu0
        %v1531 = vpop.trf.xlu0
        %v1532 = vpop.trf.xlu0
        %v1533 = vpop.trf.xlu0
        %v1534 = vpop.trf.xlu0
        %v1535 = vpop.trf.xlu0
        %v1536 = vpop.trf.xlu0
        %v1537 = vpop.trf.xlu0
        %v1538 = vpop.trf.xlu0
        %v1539 = vpop.trf.xlu0
        %v1540 = vpop.trf.xlu0
        %v1541 = vpop.trf.xlu0
        %v1542 = vpop.trf.xlu0
        %v1543 = vpop.trf.xlu0
        %v1544 = vpop.trf.xlu0
        %1545 = vxpose.xlu0.b32.start [1/16] %v1464, 128
        %1546 = vxpose.xlu0.b32.cont [2/16] %v1465, 128
        %1547 = vxpose.xlu0.b32.cont [3/16] %v1466, 128
        %1548 = vxpose.xlu0.b32.cont [4/16] %v1467, 128
        %1549 = vxpose.xlu0.b32.cont [5/16] %v1468, 128
        %1550 = vxpose.xlu0.b32.cont [6/16] %v1469, 128
        %1551 = vxpose.xlu0.b32.cont [7/16] %v1470, 128
        %1552 = vxpose.xlu0.b32.cont [8/16] %v1471, 128
        %1553 = vxpose.xlu0.b32.cont [9/16] %v1472, 128
        %1554 = vxpose.xlu0.b32.cont [10/16] %v1473, 128
        %1555 = vxpose.xlu0.b32.cont [11/16] %v1474, 128
        %1556 = vxpose.xlu0.b32.cont [12/16] %v1475, 128
        %1557 = vxpose.xlu0.b32.cont [13/16] %v1476, 128
        %1558 = vxpose.xlu0.b32.cont [14/16] %v1477, 128
        %1559 = vxpose.xlu0.b32.cont [15/16] %v1478, 128
        %1560 = vxpose.xlu0.b32.end [16/16] %v1479, 128
        %v1561 = vpop.trf.xlu0
        %v1562 = vpop.trf.xlu0
        %v1563 = vpop.trf.xlu0
        %v1564 = vpop.trf.xlu0
        %v1565 = vpop.trf.xlu0
        %v1566 = vpop.trf.xlu0
        %v1567 = vpop.trf.xlu0
        %v1568 = vpop.trf.xlu0
        %v1569 = vpop.trf.xlu0
        %v1570 = vpop.trf.xlu0
        %v1571 = vpop.trf.xlu0
        %v1572 = vpop.trf.xlu0
        %v1573 = vpop.trf.xlu0
        %v1574 = vpop.trf.xlu0
        %v1575 = vpop.trf.xlu0
        %v1576 = vpop.trf.xlu0
        %1577 = vst [vmem:[%s215] sm:$0xff] %v1529
        %1578 = vst [vmem:[%s215 + $0x8] sm:$0xff] %v1561
        %1579 = vst [vmem:[%s215 + $0x10] sm:$0xff] %v1530
        %1580 = vst [vmem:[%s215 + $0x18] sm:$0xff] %v1562
        %1581 = vst [vmem:[%s215 + $0x20] sm:$0xff] %v1531
        %1582 = vst [vmem:[%s215 + $0x28] sm:$0xff] %v1563
        %1583 = vst [vmem:[%s215 + $0x30] sm:$0xff] %v1532
        %1584 = vst [vmem:[%s215 + $0x38] sm:$0xff] %v1564
        %1585 = vst [vmem:[%s215 + $0x40] sm:$0xff] %v1533
        %1586 = vst [vmem:[%s215 + $0x48] sm:$0xff] %v1565
        %1587 = vst [vmem:[%s215 + $0x50] sm:$0xff] %v1534
        %1588 = vst [vmem:[%s215 + $0x58] sm:$0xff] %v1566
        %1589 = vst [vmem:[%s215 + $0x60] sm:$0xff] %v1535
        %1590 = vst [vmem:[%s215 + $0x68] sm:$0xff] %v1567
        %1591 = vst [vmem:[%s215 + $0x70] sm:$0xff] %v1536
        %1592 = vst [vmem:[%s215 + $0x78] sm:$0xff] %v1568
        %s1593 = sadd.s32 %s23, %s24
        %s1594 = smul.u32 32, %s1593
        %p1595 = scmp.lt.s32.totalorder %s1594, 63
        %s1596 = scalar_select %p1595, %s1594, 63
        %s1597 = smul.addr %s1596, 8
        %s1598 = scalar_lea.vmem %s3, %s1597
        %s1599 = sand.u32 %s137, 1
        %s1600 = scalar_lea.sflag [#allocation3], %s1599
        %s1601 = sand.u32 %s137, 1
        %s1602 = smul.addr %s1601, 128
        %s1603 = scalar_lea.vmem [#allocation2], %s1602
        // Predicated region
        $region33: #{tpu_custom_call.1} parent=31 // pred_check
          %p1604 = pneg %p119
        $region34: #{tpu_custom_call.1} parent=31 // pred_check_branch
          %1606 = sbr.rel (%p1604) target = $region36
        $region35: #{tpu_custom_call.1} parent=31 // pred_region
          %s1607 = sadd.s32 %s23, %s24
          %s1608 = smul.u32 32, %s1607
        $region36: #{tpu_custom_call.1} parent=31 // pred_fallthru
          _
        // Predicated region
        $region37: #{tpu_custom_call.1} parent=31 // pred_check
          %p1609 = pneg %p147
        $region38: #{tpu_custom_call.1} parent=31 // pred_check_branch
          %1611 = sbr.rel (%p1609) target = $region40
        $region39: #{tpu_custom_call.1} parent=31 // pred_region
          %s1612 = smul.u32 2, %s24
          %s1614 = ssub.s32 2048, 2048
          %1615 = vsyncadd %s1600, %s1614
          %s1616 = smul.addr %s23, 16
          %s1617 = sadd.s32 %s1612, %s1616
          %s1618 = smul.addr %s1617, 128
          %s1619 = scalar_lea.hbm %s4, %s1618
          %s1620 = sshll.u32 %s1603, 4
          %s1621 = int_to_ptr.vmem [resolvable:$true] %s1620
          %1626 = dma.vmem_to_hbm [thread:$0]  %s1621, 2048, %s1619, %s1600, 256, 256, 16
        $region40: #{tpu_custom_call.1} parent=31 // pred_fallthru
          _
      $region32: #{tpu_custom_call.1} parent=5 // pred_fallthru
        _
      %p1627 = scmp.le.s32.totalorder 2, %s14
      // Predicated region
      $region41: #{tpu_custom_call.1} parent=5 // pred_check
        %p1628 = pneg %p1627
      $region42: #{tpu_custom_call.1} parent=5 // pred_check_branch
        %1630 = sbr.rel (%p1628) target = $region44
      $region43: #{tpu_custom_call.1} parent=5 // pred_region
        %s1631 = ssub.s32 %s14, 2
        // Predicated region
        $region45: #{tpu_custom_call.1} parent=43 // pred_check
          %p1632 = pneg %p125
        $region46: #{tpu_custom_call.1} parent=43 // pred_check_branch
          %1634 = sbr.rel (%p1632) target = $region48
        $region47: #{tpu_custom_call.1} parent=43 // pred_region
          %s1635 = sadd.s32 %s25, %s26
          %s1636 = smul.u32 32, %s1635
          %p1637 = scmp.lt.s32.totalorder %s1636, 63
          %s1638 = scalar_select %p1637, %s1636, 63
          %s1639 = smul.addr %s1638, 8
          %s1640 = scalar_lea.vmem %s3, %s1639
        $region48: #{tpu_custom_call.1} parent=43 // pred_fallthru
          _
        // Predicated region
        $region49: #{tpu_custom_call.1} parent=43 // pred_check
          %p1641 = pneg %p153
        $region50: #{tpu_custom_call.1} parent=43 // pred_check_branch
          %1643 = sbr.rel (%p1641) target = $region52
        $region51: #{tpu_custom_call.1} parent=43 // pred_region
          %s1644 = sand.u32 %s138, 1
          %s1645 = scalar_lea.sflag [#allocation3], %s1644
          %s1646 = sand.u32 %s138, 1
          %s1647 = smul.addr %s1646, 128
          %s1648 = scalar_lea.vmem [#allocation2], %s1647
          %1649 = dma.done %s1645, 2048
        $region52: #{tpu_custom_call.1} parent=43 // pred_fallthru
          _
      $region44: #{tpu_custom_call.1} parent=5 // pred_fallthru
        _
    $region6: #{tpu_custom_call.1} parent=1 // loop_footer
      %s18 = sadd.s32 1, %s14
    $region7: #{tpu_custom_call.1} parent=1 // loop_footer_branch
      %13 = sbr.rel target = $region3
    $region8: #{tpu_custom_call.1} parent=1 // loop_exit
      _
    %1650 = vsyncpa [#allocation3], 1
    %s1651 = scalar_lea.sflag [#allocation3], 1
    %1652 = vsyncpa %s1651, 1

</llo_original>
